<compile_context>
chip_gen: v5e
topology: v5e:2x2
jax: 0.10.0
libtpu: 0.0.40
codegen_flags: <defaults>
</compile_context>

<pallas_src>
import jax
import jax.numpy as jnp
from jax.experimental import pallas as pl
from jax.experimental.pallas import tpu as pltpu


# ----------------------------------------------------------------------------
# small helpers
# ----------------------------------------------------------------------------
def _cdiv(a, b):
    return -(-a // b)


def _round_up(a, b):
    return _cdiv(a, b) * b


def _choose_tm(m):
    # Prefer large tiles (pipeline efficiency) but keep >=2 grid steps so the
    # "parallel" M axis can be split across both TensorCores on v7x.
    for tm in (512, 256, 128):
        if _cdiv(m, tm) >= 2:
            return tm
    return _round_up(m, 8)          # tiny M: single tile


_MAX_SINGLE_K = 2048                # single full-K block below this
_TK = 1024                          # K tile when the reduction axis is tiled
_VMEM_SOFT = 24 * 2**20             # raise the scoped limit above this estimate
_VMEM_CAP = 64 * 2**20              # never request more than v7x physical VMEM


def _vmem_limit(est_bytes):
    if est_bytes <= _VMEM_SOFT:
        return None
    return int(min(2 * est_bytes, _VMEM_CAP))


# ----------------------------------------------------------------------------
# Kernel 1: out = epilogue( X @ W )   (BN scale pre-folded into W)
#   epilogue = + shift [+ residual], then ReLU (all / none / per-column mask)
# ----------------------------------------------------------------------------
def _make_gemm_kernel(relu, has_mask, has_res, nk):
    def epilogue(y, sh_ref, mask_ref, res_ref, o_ref):
        y = y + sh_ref[...]
        if res_ref is not None:
            y = y + res_ref[...].astype(jnp.float32)
        if has_mask:
            m = mask_ref[...]                        # (1, Cout) 0/1 f32
            y = m * jnp.maximum(y, 0.0) + (1.0 - m) * y
        elif relu:
            y = jnp.maximum(y, 0.0)
        o_ref[...] = y.astype(o_ref.dtype)

    def kernel(*refs):
        it = iter(refs)
        x_ref = next(it)
        w_ref = next(it)
        sh_ref = next(it)
        mask_ref = next(it) if has_mask else None
        res_ref = next(it) if has_res else None
        o_ref = next(it)

        if nk == 1:
            y = jnp.dot(x_ref[...], w_ref[...],
                        preferred_element_type=jnp.float32)
            epilogue(y, sh_ref, mask_ref, res_ref, o_ref)
            return

        acc_ref = next(it)
        k = pl.program_id(1)

        @pl.when(k == 0)
        def _():
            acc_ref[...] = jnp.zeros_like(acc_ref)

        acc_ref[...] += jnp.dot(x_ref[...], w_ref[...],
                                preferred_element_type=jnp.float32)

        @pl.when(k == nk - 1)
        def _():
            epilogue(acc_ref[...], sh_ref, mask_ref, res_ref, o_ref)

    return kernel


def fused_gemm(x, w, shift, relu, res=None):
    """epilogue(x @ w); epilogue = + shift [+ res] then ReLU.

    relu: True / False, or a (1, Cout) 0/1 f32 mask selecting which output
          columns get ReLU (used when two point-wise convs share one GEMM).
    x: (M, K), w: (K, Cout) with BN scale pre-folded, shift: (1, Cout) f32,
    res: optional (M, Cout).  Returns (M, Cout) bf16.
    """
    has_mask = not isinstance(relu, bool)
    has_res = res is not None

    x = x.astype(jnp.bfloat16)
    w = w.astype(jnp.bfloat16)
    M, K = x.shape
    Cout = w.shape[1]

    TM = _choose_tm(M)
    Mp = _round_up(M, TM)
    nm = Mp // TM

    if K <= _MAX_SINGLE_K:
        TK, Kp, nk = K, K, 1
    else:
        TK = _TK
        Kp = _round_up(K, TK)
        nk = Kp // TK

    if Mp != M or Kp != K:
        x = jnp.pad(x, ((0, Mp - M), (0, Kp - K)))
    if Kp != K:
        w = jnp.pad(w, ((0, Kp - K), (0, 0)))

    operands = [x, w, shift]
    if has_mask:
        operands.append(relu.astype(jnp.float32).reshape(1, Cout))
    if has_res:
        r = res.astype(jnp.bfloat16)
        if Mp != M:
            r = jnp.pad(r, ((0, Mp - M), (0, 0)))
        operands.append(r)

    def build_specs(fx, fw, fb, fm):
        specs = [pl.BlockSpec((TM, TK), fx),
                 pl.BlockSpec((TK, Cout), fw),
                 pl.BlockSpec((1, Cout), fb)]
        if has_mask:
            specs.append(pl.BlockSpec((1, Cout), fb))
        if has_res:
            specs.append(pl.BlockSpec((TM, Cout), fm))
        return specs

    if nk == 1:
        grid = (nm,)
        in_specs = build_specs(lambda i: (i, 0), lambda i: (0, 0),
                               lambda i: (0, 0), lambda i: (i, 0))
        out_spec = pl.BlockSpec((TM, Cout), lambda i: (i, 0))
        scratch = ()
        semantics = ("parallel",)
    else:
        grid = (nm, nk)                     # reduction axis last, "arbitrary"
        in_specs = build_specs(lambda i, k: (i, k), lambda i, k: (k, 0),
                               lambda i, k: (0, 0), lambda i, k: (i, 0))
        out_spec = pl.BlockSpec((TM, Cout), lambda i, k: (i, 0))
        scratch = (pltpu.VMEM((TM, Cout), jnp.float32),)
        semantics = ("parallel", "arbitrary")

    est = 2 * 2 * (TM * TK + TK * Cout + TM * Cout * (2 if has_res else 1))
    est += 4 * (TM * Cout + 2 * Cout)
    bytes_accessed = (Mp * Kp + Kp * Cout + (Mp * Cout if has_res else 0)
                      + Mp * Cout) * 2 + Cout * 4 * (2 if has_mask else 1)

    out = pl.pallas_call(
        _make_gemm_kernel(False if has_mask else relu, has_mask, has_res, nk),
        out_shape=jax.ShapeDtypeStruct((Mp, Cout), jnp.bfloat16),
        grid=grid,
        in_specs=in_specs,
        out_specs=out_spec,
        scratch_shapes=scratch,
        compiler_params=pltpu.CompilerParams(
            dimension_semantics=semantics,
            vmem_limit_bytes=_vmem_limit(est)),
        cost_estimate=pl.CostEstimate(
            flops=2 * M * K * Cout,
            transcendentals=0,
            bytes_accessed=int(bytes_accessed)),
    )(*operands)
    return out[:M] if Mp != M else out


# ----------------------------------------------------------------------------
# Kernel 2: chained GEMM  out = relu( relu(X @ W1 + b1) @ W2 + b2 + res )
#   = conv2(3x3x3)+BN+ReLU -> conv3(1x1)+BN -> +residual -> ReLU, one launch,
#     intermediate activation stays in VMEM.
# ----------------------------------------------------------------------------
def _chain_kernel(x_ref, w1_ref, sh1_ref, w2_ref, sh2_ref, res_ref, o_ref):
    y = jnp.dot(x_ref[...], w1_ref[...], preferred_element_type=jnp.float32)
    y = jnp.maximum(y + sh1_ref[...], 0.0).astype(jnp.bfloat16)
    z = jnp.dot(y, w2_ref[...], preferred_element_type=jnp.float32)
    z = z + sh2_ref[...] + res_ref[...].astype(jnp.float32)
    o_ref[...] = jnp.maximum(z, 0.0).astype(o_ref.dtype)


def fused_chain_gemm(x, w1, sh1, w2, sh2, res):
    """relu( relu(x @ w1 + sh1) @ w2 + sh2 + res ) in one pallas_call."""
    M, K = x.shape
    C1 = w1.shape[1]
    C2 = w2.shape[1]
    if K > _MAX_SINGLE_K:
        # TODO(synk): very large contraction dims fall back to two launches
        # (K-tiled accumulation inside the chained kernel is not implemented).
        y = fused_gemm(x, w1, sh1, relu=True)
        return fused_gemm(y, w2, sh2, relu=True, res=res)

    x = x.astype(jnp.bfloat16)
    res = res.astype(jnp.bfloat16)

    # Pad only the *internal* width to a full 128-lane multiple: free on the
    # MXU (padded columns are exact zeros), never touches HBM, keeps the
    # chained dot lane-dense.
    C1p = _round_up(C1, 128)
    w1p = jnp.pad(w1.astype(jnp.bfloat16), ((0, 0), (0, C1p - C1)))
    sh1p = jnp.pad(sh1, ((0, 0), (0, C1p - C1)))
    w2p = jnp.pad(w2.astype(jnp.bfloat16), ((0, C1p - C1), (0, 0)))

    TM = _choose_tm(M)
    Mp = _round_up(M, TM)
    nm = Mp // TM
    if Mp != M:
        x = jnp.pad(x, ((0, Mp - M), (0, 0)))
        res = jnp.pad(res, ((0, Mp - M), (0, 0)))

    in_specs = [pl.BlockSpec((TM, K), lambda i: (i, 0)),
                pl.BlockSpec((K, C1p), lambda i: (0, 0)),
                pl.BlockSpec((1, C1p), lambda i: (0, 0)),
                pl.BlockSpec((C1p, C2), lambda i: (0, 0)),
                pl.BlockSpec((1, C2), lambda i: (0, 0)),
                pl.BlockSpec((TM, C2), lambda i: (i, 0))]
    out_spec = pl.BlockSpec((TM, C2), lambda i: (i, 0))

    est = 2 * 2 * (TM * K + K * C1p + C1p * C2 + 2 * TM * C2)
    est += 4 * (TM * C1p + C1p + C2)
    bytes_accessed = (Mp * K + K * C1 + C1 * C2 + 2 * Mp * C2) * 2 + (C1 + C2) * 4

    out = pl.pallas_call(
        _chain_kernel,
        out_shape=jax.ShapeDtypeStruct((Mp, C2), jnp.bfloat16),
        grid=(nm,),
        in_specs=in_specs,
        out_specs=out_spec,
        compiler_params=pltpu.CompilerParams(
            dimension_semantics=("parallel",),
            vmem_limit_bytes=_vmem_limit(est)),
        cost_estimate=pl.CostEstimate(
            flops=2 * M * (K * C1 + C1 * C2),
            transcendentals=0,
            bytes_accessed=int(bytes_accessed)),
    )(x, w1p, sh1p, w2p, sh2, res)
    return out[:M] if Mp != M else out


# ----------------------------------------------------------------------------
# Conv lowering glue (channels-last, bf16)
# ----------------------------------------------------------------------------
def _fold_w(p):
    """Fold BN scale into the conv weight.  Returns ((K, Cout) matrix, shift)."""
    w = p["w"]                                   # (Cout, Cin, kt, kh, kw) f32
    Cout, Cin, kt, kh, kw = w.shape
    if (kt, kh, kw) == (1, 1, 1):
        m = w.reshape(Cout, Cin).T
    else:
        m = jnp.transpose(w, (2, 3, 4, 1, 0)).reshape(kt * kh * kw * Cin, Cout)
    return m * p["scale"], p["shift"]


def _im2col(x, ksize, stride, pad):
    """Channels-last bf16 im2col.  x: (N,T,H,W,C) -> ((M, kt*kh*kw*C), dims)."""
    # TODO(synk): im2col columns for the k>1 convs are still materialized in
    # HBM (bf16, channels-last); a fully in-kernel tap accumulation would
    # remove the remaining kt*kh*kw read amplification.
    kt, kh, kw = ksize
    st, sh, sw = stride
    pt, ph, pw = pad
    if pt or ph or pw:
        x = jnp.pad(x, ((0, 0), (pt, pt), (ph, ph), (pw, pw), (0, 0)))
    N, Tp, Hp, Wp, C = x.shape
    To = (Tp - kt) // st + 1
    Ho = (Hp - kh) // sh + 1
    Wo = (Wp - kw) // sw + 1
    taps = []
    for dt in range(kt):
        for dh in range(kh):
            for dw in range(kw):
                taps.append(x[:, dt:dt + (To - 1) * st + 1:st,
                                 dh:dh + (Ho - 1) * sh + 1:sh,
                                 dw:dw + (Wo - 1) * sw + 1:sw, :])
    cols = jnp.stack(taps, axis=4)               # (N, To, Ho, Wo, K3, C)
    return cols.reshape(N * To * Ho * Wo, kt * kh * kw * C), (N, To, Ho, Wo)


def stem_forward(x, p):
    # Conv3d(3, c0, (3,9,9), stride=(1,4,4), pad=(1,4,4), bias=False)+BN+ReLU
    cols, (N, To, Ho, Wo) = _im2col(x, (3, 9, 9), (1, 4, 4), (1, 4, 4))
    wmat, shift = _fold_w(p)
    out = fused_gemm(cols, wmat, shift, relu=True)
    return out.reshape(N, To, Ho, Wo, -1)


def res_block(x, p, stride, has_ds):
    """ResBlock3D: conv1(1x1,s)+BN+ReLU -> conv2(3x3x3)+BN+ReLU ->
    conv3(1x1)+BN, residual add (optionally downsampled 1x1+BN), final ReLU."""
    st, sh_, sw = stride
    xs = x[:, ::st, ::sh_, ::sw, :]              # pointwise stride = slice
    N, To, Ho, Wo, Cin = xs.shape
    x2d = xs.reshape(N * To * Ho * Wo, Cin)

    w1, b1 = _fold_w(p["conv1"])                 # (Cin, itm)
    itm = w1.shape[1]
    if has_ds:
        # conv1 and the downsample conv share the same input & stride: run
        # both as ONE GEMM with concatenated weights; ReLU only on conv1's
        # columns (per-column mask in the kernel epilogue).
        wd, bd = _fold_w(p["ds"])                # (Cin, out)
        out_ch = wd.shape[1]
        mask = jnp.concatenate([jnp.ones((1, itm), jnp.float32),
                                jnp.zeros((1, out_ch), jnp.float32)], axis=1)
        both = fused_gemm(x2d, jnp.concatenate([w1, wd], axis=1),
                          jnp.concatenate([b1, bd], axis=1), relu=mask)
        y1, res = both[:, :itm], both[:, itm:]
    else:
        y1 = fused_gemm(x2d, w1, b1, relu=True)
        res = x2d                                # identity residual (stride 1)

    y1 = y1.reshape(N, To, Ho, Wo, itm)
    cols, _ = _im2col(y1, (3, 3, 3), (1, 1, 1), (1, 1, 1))
    w2, b2 = _fold_w(p["conv2"])                 # (27*itm, itm)
    w3, b3 = _fold_w(p["conv3"])                 # (itm, out)
    out = fused_chain_gemm(cols, w2, b2, w3, b3, res)
    return out.reshape(N, To, Ho, Wo, w3.shape[1])


# ----------------------------------------------------------------------------
# Model definition (parameters + forward)
# ----------------------------------------------------------------------------
def _init_conv_bn(key, cout, cin, ksize):
    kw_, kg, kb, km, kv = jax.random.split(key, 5)
    w = 0.05 * jax.random.normal(kw_, (cout, cin) + tuple(ksize), jnp.float32)
    gamma = 1.0 + 0.1 * jax.random.normal(kg, (cout,), jnp.float32)
    beta = 0.1 * jax.random.normal(kb, (cout,), jnp.float32)
    mean = 0.1 * jax.random.normal(km, (cout,), jnp.float32)
    var = 1.0 + 0.5 * jax.random.uniform(kv, (cout,), jnp.float32)
    eps = 1e-5
    scale = gamma / jnp.sqrt(var + eps)
    shift = beta - mean * scale
    return {"w": w, "scale": scale.reshape(1, -1), "shift": shift.reshape(1, -1)}


def make_params(key, in_ch=3, enc_chs=(8, 16), exps=4):
    keys = iter(jax.random.split(key, 32))

    def cbn(cout, cin, k):
        ks = (k, k, k) if isinstance(k, int) else k
        return _init_conv_bn(next(keys), cout, cin, ks)

    c0, c1 = enc_chs
    return {
        "stem": cbn(c0, in_ch, (3, 9, 9)),
        "l1b1": {"conv1": cbn(c0, c0, 1), "conv2": cbn(c0, c0, 3),
                 "conv3": cbn(c0 * exps, c0, 1), "ds": cbn(c0 * exps, c0, 1)},
        "l1b2": {"conv1": cbn(c0, c0 * exps, 1), "conv2": cbn(c0, c0, 3),
                 "conv3": cbn(c0 * exps, c0, 1)},
        "l2b1": {"conv1": cbn(c1, c0 * exps, 1), "conv2": cbn(c1, c1, 3),
                 "conv3": cbn(c1 * exps, c1, 1),
                 "ds": cbn(c1 * exps, c0 * exps, 1)},
        "l2b2": {"conv1": cbn(c1, c1 * exps, 1), "conv2": cbn(c1, c1, 3),
                 "conv3": cbn(c1 * exps, c1, 1)},
    }


def _to_ncdhw(x):
    return jnp.transpose(x, (0, 4, 1, 2, 3)).astype(jnp.float32)


def video_encoder_forward(x, params):
    """x: (N, C, T, H, W) f32 (PyTorch NCDHW). Returns [x, layer1, layer2]."""
    feats = [x]
    h = jnp.transpose(x, (0, 2, 3, 4, 1)).astype(jnp.bfloat16)   # NDHWC bf16
    h = stem_forward(h, params["stem"])
    # layer1
    h = res_block(h, params["l1b1"], stride=(1, 1, 1), has_ds=True)
    h = res_block(h, params["l1b2"], stride=(1, 1, 1), has_ds=False)
    feats.append(_to_ncdhw(h))
    # layer2
    h = res_block(h, params["l2b1"], stride=(2, 2, 2), has_ds=True)
    h = res_block(h, params["l2b2"], stride=(1, 1, 1), has_ds=False)
    feats.append(_to_ncdhw(h))
    return feats


# ----------------------------------------------------------------------------
if __name__ == "__main__":
    key = jax.random.PRNGKey(0)
    k_x, k_p, k_a, k_b, k_c, k_d, k_e, k_f = jax.random.split(key, 8)

    # --- self-check 1: K-tiled (accumulator) GEMM path vs plain jnp ---------
    xt = jax.random.normal(k_a, (300, 2600), jnp.float32).astype(jnp.bfloat16)
    wt = (0.05 * jax.random.normal(k_b, (2600, 96), jnp.float32)).astype(jnp.bfloat16)
    sh = 0.1 * jax.random.normal(k_c, (1, 96), jnp.float32)
    got = fused_gemm(xt, wt, sh, relu=True).astype(jnp.float32)
    want = jnp.maximum(
        jnp.dot(xt.astype(jnp.float32), wt.astype(jnp.float32)) + sh, 0.0)
    assert bool(jnp.allclose(got, want, rtol=2e-2, atol=2e-2))

    # --- self-check 2: per-column ReLU-mask epilogue -------------------------
    xm = jax.random.normal(k_d, (128, 64), jnp.float32).astype(jnp.bfloat16)
    wm = (0.1 * jax.random.normal(k_e, (64, 48), jnp.float32)).astype(jnp.bfloat16)
    shm = 0.1 * jax.random.normal(k_f, (1, 48), jnp.float32)
    msk = jnp.concatenate([jnp.ones((1, 16)), jnp.zeros((1, 32))],
                          axis=1).astype(jnp.float32)
    got = fused_gemm(xm, wm, shm, relu=msk).astype(jnp.float32)
    ref = jnp.dot(xm.astype(jnp.float32), wm.astype(jnp.float32)) + shm
    ref = msk * jnp.maximum(ref, 0.0) + (1.0 - msk) * ref
    assert bool(jnp.allclose(got, ref, rtol=2e-2, atol=2e-2))

    # --- self-check 3: chained GEMM (conv2->conv3->res->ReLU) ---------------
    kc = jax.random.split(k_a, 6)
    xc = jax.random.normal(kc[0], (200, 432), jnp.float32).astype(jnp.bfloat16)
    wc1 = (0.05 * jax.random.normal(kc[1], (432, 16), jnp.float32)).astype(jnp.bfloat16)
    bc1 = 0.1 * jax.random.normal(kc[2], (1, 16), jnp.float32)
    wc2 = (0.1 * jax.random.normal(kc[3], (16, 64), jnp.float32)).astype(jnp.bfloat16)
    bc2 = 0.1 * jax.random.normal(kc[4], (1, 64), jnp.float32)
    rc = jax.random.normal(kc[5], (200, 64), jnp.float32).astype(jnp.bfloat16)
    got = fused_chain_gemm(xc, wc1, bc1, wc2, bc2, rc).astype(jnp.float32)
    y = jnp.maximum(jnp.dot(xc.astype(jnp.float32), wc1.astype(jnp.float32)) + bc1, 0.0)
    y = y.astype(jnp.bfloat16).astype(jnp.float32)
    ref = jnp.maximum(jnp.dot(y, wc2.astype(jnp.float32)) + bc2
                      + rc.astype(jnp.float32), 0.0)
    assert bool(jnp.allclose(got, ref, rtol=2e-2, atol=2e-2))

    # --- full model: N=2, C=3, T=4, H=W=16 (NCDHW, as in PyTorch) ------------
    x = jax.random.normal(k_x, (2, 3, 4, 16, 16), jnp.float32)
    params = make_params(k_p, in_ch=3, enc_chs=(8, 16), exps=4)

    fwd = jax.jit(video_encoder_forward)
    feats = jax.block_until_ready(fwd(x, params))

    # feats[0] = input (2,3,4,16,16); feats[1] = layer1 (2,32,4,4,4);
    # feats[2] = layer2 (2,64,2,2,2)
    assert feats[0].shape == (2, 3, 4, 16, 16)
    assert feats[1].shape == (2, 32, 4, 4, 4)
    assert feats[2].shape == (2, 64, 2, 2, 2)
    assert all(bool(jnp.all(jnp.isfinite(f))) for f in feats)

    print("KERNEL_OK")
</pallas_src>

<mosaic_0001>
module attributes {stable_mosaic.version = 11 : i64} {
  func.func @kernel(%arg0: i32, %arg1: i32, %arg2: memref<256x1024xbf16, #tpu.memory_space<vmem>>, %arg3: memref<1024x96xbf16, #tpu.memory_space<vmem>>, %arg4: memref<1x96xf32, #tpu.memory_space<vmem>>, %arg5: memref<256x96xbf16, #tpu.memory_space<vmem>>, %arg6: memref<256x96xf32, #tpu.memory_space<vmem>>) attributes {dimension_semantics = [#tpu.dimension_semantics<parallel>, #tpu.dimension_semantics<arbitrary>], iteration_bounds = array<i64: 2, 3>, scalar_prefetch = 0 : i64, scratch_operands = 1 : i64, tpu.core_type = #tpu.core_type<tc>, window_params = [{transform_indices = @transform_0, window_bounds = array<i64: 256, 1024>}, {transform_indices = @transform_1, window_bounds = array<i64: 1024, 96>}, {pipeline_mode = #tpu.pipeline_mode<synchronous>, transform_indices = @transform_2, window_bounds = array<i64: 1, 96>}, {transform_indices = @transform_3, window_bounds = array<i64: 256, 96>}]} {
    %c0_i32 = arith.constant 0 : i32
    %0 = arith.cmpi eq, %arg1, %c0_i32 : i32
    %1 = arith.extui %0 : i1 to i32
    %c0_i32_0 = arith.constant 0 : i32
    %2 = arith.cmpi ne, %1, %c0_i32_0 : i32
    scf.if %2 {
      %cst_9 = arith.constant 0.000000e+00 : f32
      %12 = vector.broadcast %cst_9 : f32 to vector<256x96xf32>
      %c0_10 = arith.constant 0 : index
      %c0_11 = arith.constant 0 : index
      %13 = vector.load %arg6[%c0_10, %c0_11] : memref<256x96xf32, #tpu.memory_space<vmem>>, vector<256x96xf32>
      tpu.vector_store %arg6[%c0_10, %c0_11], %12 {strides = array<i32>} : memref<256x96xf32, #tpu.memory_space<vmem>>, vector<256x96xf32>,
    } else {
    }
    %c0 = arith.constant 0 : index
    %c0_1 = arith.constant 0 : index
    %3 = vector.load %arg6[%c0, %c0_1] : memref<256x96xf32, #tpu.memory_space<vmem>>, vector<256x96xf32>
    %c0_2 = arith.constant 0 : index
    %c0_3 = arith.constant 0 : index
    %4 = vector.load %arg2[%c0_2, %c0_3] : memref<256x1024xbf16, #tpu.memory_space<vmem>>, vector<256x1024xbf16>
    %c0_4 = arith.constant 0 : index
    %c0_5 = arith.constant 0 : index
    %5 = vector.load %arg3[%c0_4, %c0_5] : memref<1024x96xbf16, #tpu.memory_space<vmem>>, vector<1024x96xbf16>
    %cst = arith.constant dense<0.000000e+00> : vector<256x96xf32>
    %6 = tpu.matmul %4, %5, %cst {dimension_numbers = #tpu.dot_dimension_numbers<[1], [0], [0], [1], [0, 0, 1, 1], [], []>} : vector<256x1024xbf16>, vector<1024x96xbf16>, vector<256x96xf32> -> vector<256x96xf32>
    %7 = arith.addf %3, %6 : vector<256x96xf32>
    %c0_6 = arith.constant 0 : index
    %c0_7 = arith.constant 0 : index
    %8 = vector.load %arg6[%c0_6, %c0_7] : memref<256x96xf32, #tpu.memory_space<vmem>>, vector<256x96xf32>
    tpu.vector_store %arg6[%c0_6, %c0_7], %7 {strides = array<i32>} : memref<256x96xf32, #tpu.memory_space<vmem>>, vector<256x96xf32>,
    %c2_i32 = arith.constant 2 : i32
    %9 = arith.cmpi eq, %arg1, %c2_i32 : i32
    %10 = arith.extui %9 : i1 to i32
    %c0_i32_8 = arith.constant 0 : i32
    %11 = arith.cmpi ne, %10, %c0_i32_8 : i32
    scf.if %11 {
      %c0_9 = arith.constant 0 : index
      %c0_10 = arith.constant 0 : index
      %12 = vector.load %arg6[%c0_9, %c0_10] : memref<256x96xf32, #tpu.memory_space<vmem>>, vector<256x96xf32>
      %c0_11 = arith.constant 0 : index
      %c0_12 = arith.constant 0 : index
      %13 = vector.load %arg4[%c0_11, %c0_12] : memref<1x96xf32, #tpu.memory_space<vmem>>, vector<1x96xf32>
      %14 = vector.broadcast %13 : vector<1x96xf32> to vector<256x96xf32>
      %15 = arith.addf %12, %14 : vector<256x96xf32>
      %cst_13 = arith.constant 0.000000e+00 : f32
      %16 = vector.broadcast %cst_13 : f32 to vector<256x96xf32>
      %17 = arith.maximumf %15, %16 : vector<256x96xf32>
      %18 = arith.truncf %17 : vector<256x96xf32> to vector<256x96xbf16>
      %c0_14 = arith.constant 0 : index
      %c0_15 = arith.constant 0 : index
      %19 = vector.load %arg5[%c0_14, %c0_15] : memref<256x96xbf16, #tpu.memory_space<vmem>>, vector<256x96xbf16>
      tpu.vector_store %arg5[%c0_14, %c0_15], %18 {strides = array<i32>} : memref<256x96xbf16, #tpu.memory_space<vmem>>, vector<256x96xbf16>,
    } else {
    }
    return
  }
  func.func @transform_0(%arg0: i32, %arg1: i32) -> (i32, i32) {
    %c0_i32 = arith.constant 0 : i32
    return %arg0, %arg1 : i32, i32
  }
  func.func @transform_1(%arg0: i32, %arg1: i32) -> (i32, i32) {
    %c0_i32 = arith.constant 0 : i32
    %c0_i32_0 = arith.constant 0 : i32
    return %arg1, %c0_i32 : i32, i32
  }
  func.func @transform_2(%arg0: i32, %arg1: i32) -> (i32, i32) {
    %c0_i32 = arith.constant 0 : i32
    %c0_i32_0 = arith.constant 0 : i32
    %c0_i32_1 = arith.constant 0 : i32
    return %c0_i32, %c0_i32_0 : i32, i32
  }
  func.func @transform_3(%arg0: i32, %arg1: i32) -> (i32, i32) {
    %c0_i32 = arith.constant 0 : i32
    %c0_i32_0 = arith.constant 0 : i32
    return %arg0, %c0_i32 : i32, i32
  }
}

</mosaic_0001>

<llo_original>
// kernel: tpu_custom_call.1
$region0: #{tpu_custom_call.1}
  #allocation0 [shape = 'u32[]', space=smem, size = 0x4, offset = 0x4, fixed_abs, tag = 'smem constant byte address 0x4 - core index']
  #allocation1 [shape = 'u32[72,128]{1,0:T(1,128)}', space=vmem, size = 0x9000, scoped, tag = 'internal scratch']
  #allocation2 [shape = 'f32[256,96]{1,0:T(8,128)}', space=vmem, size = 0x20000, scoped, tag = 'scratch operand']
  %s0 = inlined_call_operand.hbm [shape: bf16[512,3072], index: 0, kind: input, shape index: {}]
  %s1 = inlined_call_operand.vmem [shape: bf16[3072,96], index: 1, kind: input, shape index: {}]
  %s2 = inlined_call_operand.hbm [shape: f32[1,96], index: 2, kind: input, shape index: {}]
  %s3 = inlined_call_operand.vmem [shape: bf16[512,96], index: 3, kind: output, shape index: {}]
  %s4 = sld [smem:[#allocation0]]
  $region61: #{tpu_custom_call.1} parent=0
    _
  %s6 = ssub.s32 1, %s4
  %s7 = scalar_select 0, %s6, %s4
  $region1: #{tpu_custom_call.1} parent=0
    #allocation3 [shape = 'u8[1048576]{0}', space=vmem, size = 0x100000, scoped, tag = 'input window, operand 0']
    #allocation4 [shape = 's32[2]{0}', space=sflag, size = 0x8, scoped, tag = 'scoped memory for tpu_custom_call.1']
    #allocation5 [shape = 'u8[512]{0}', space=vmem, size = 0x400, scoped, tag = 'input window, operand 2, single buffered']
    #allocation6 [shape = 's32[1]{0}', space=sflag, size = 0x4, scoped, tag = 'scoped memory for tpu_custom_call.1']
    %8 = vsyncpa [#allocation4], 0
    %s9 = scalar_lea.sflag [#allocation4], 1
    %10 = vsyncpa %s9, 0
    %11 = vsyncpa [#allocation6], 0
    loop: start=0, step=1, limit=8
    $region2: #{tpu_custom_call.1} parent=1 // loop_pre_header
      _
    $region3: #{tpu_custom_call.1} parent=1 // loop_header
      %s13 = sphi 0, %s17
      %p14 = scmp.ge.s32.totalorder %s13, 8
      %s20 = sphi 0, %s32
      %s21 = sphi 0, %s28
      %s22 = sphi 0, %s20
      %s23 = sphi 0, %s21
      %s24 = sphi 0, %s22
      %s25 = sphi 0, %s23
      %s37 = sphi 0, %s39
      %s40 = sphi 0, %s37
      %s41 = sphi 0, %s40
      %s57 = sphi 0, %s41
      %s63 = sphi 0, %s65
      %s66 = sphi 0, %s63
      %s67 = sphi 0, %s66
      %s83 = sphi 0, %s67
      %s87 = sphi 0, %s87
      %s89 = sphi 0, %s87
      %s90 = sphi 0, %s89
      %s104 = sphi 0, %s90
      %s110 = sphi 0, %s112
      %s113 = sphi 0, %s110
      %s114 = sphi 0, %s113
      %s130 = sphi 0, %s114
    $region4: #{tpu_custom_call.1} parent=1 // loop_header_branch
      %16 = sbr.rel (%p14) target = $region8
    $region5: #{tpu_custom_call.1} parent=1 // loop_body
      %s18 = ssub.s32 %s13, 1
      %s19 = ssub.s32 %s13, 2
      %s26 = sadd.s32 1, %s21
      %p27 = scmp.ge.s32.totalorder %s26, 3
      %s28 = scalar_select %p27, 0, %s26
      %s29 = sadd.s32 1, %s20
      %s30 = scalar_select %p27, %s29, %s20
      %p31 = scmp.ge.s32.totalorder %s30, 2
      %s32 = scalar_select %p31, 0, %s30
      %s33 = ssub.s32 %s20, %s32
      %s34 = ssub.s32 %s21, %s28
      %s35 = sor.u32 %s33, %s34
      %p36 = scmp.eq.s32.totalorder %s35, 0
      %s38 = sadd.s32 %s37, 1
      %s39 = scalar_select %p36, %s37, %s38
      %p42 = pneg %p36
      %p43 = scmp.eq.s32.totalorder %s13, 5
      %p44 = por %p42, %p43
      %p45 = scmp.ne.s32.totalorder %s37, %s40
      %p46 = scmp.eq.s32.totalorder %s13, 0
      %p47 = por %p45, %p46
      %p48 = scmp.ne.s32.totalorder %s37, %s40
      %p49 = scmp.eq.s32.totalorder %s18, 5
      %p50 = por %p48, %p49
      %p51 = scmp.ne.s32.totalorder %s40, %s41
      %p52 = scmp.eq.s32.totalorder %s18, 0
      %p53 = por %p51, %p52
      %p54 = scmp.ne.s32.totalorder %s40, %s41
      %p55 = scmp.eq.s32.totalorder %s19, 5
      %p56 = por %p54, %p55
      %p58 = scmp.ne.s32.totalorder %s41, %s57
      %p59 = scmp.eq.s32.totalorder %s19, 0
      %p60 = por %p58, %p59
      %s61 = ssub.s32 %s21, %s28
      %p62 = scmp.eq.s32.totalorder %s61, 0
      %s64 = sadd.s32 %s63, 1
      %s65 = scalar_select %p62, %s63, %s64
      %p68 = pneg %p62
      %p69 = scmp.eq.s32.totalorder %s13, 5
      %p70 = por %p68, %p69
      %p71 = scmp.ne.s32.totalorder %s63, %s66
      %p72 = scmp.eq.s32.totalorder %s13, 0
      %p73 = por %p71, %p72
      %p74 = scmp.ne.s32.totalorder %s63, %s66
      %p75 = scmp.eq.s32.totalorder %s18, 5
      %p76 = por %p74, %p75
      %p77 = scmp.ne.s32.totalorder %s66, %s67
      %p78 = scmp.eq.s32.totalorder %s18, 0
      %p79 = por %p77, %p78
      %p80 = scmp.ne.s32.totalorder %s66, %s67
      %p81 = scmp.eq.s32.totalorder %s19, 5
      %p82 = por %p80, %p81
      %p84 = scmp.ne.s32.totalorder %s67, %s83
      %p85 = scmp.eq.s32.totalorder %s19, 0
      %p86 = por %p84, %p85
      %s88 = sadd.s32 %s87, 1
      %p91 = scmp.eq.s32.totalorder %s13, 5
      %p92 = scmp.ne.s32.totalorder %s87, %s89
      %p93 = scmp.eq.s32.totalorder %s13, 0
      %p94 = por %p92, %p93
      %p95 = scmp.ne.s32.totalorder %s87, %s89
      %p96 = scmp.eq.s32.totalorder %s18, 5
      %p97 = por %p95, %p96
      %p98 = scmp.ne.s32.totalorder %s89, %s90
      %p99 = scmp.eq.s32.totalorder %s18, 0
      %p100 = por %p98, %p99
      %p101 = scmp.ne.s32.totalorder %s89, %s90
      %p102 = scmp.eq.s32.totalorder %s19, 5
      %p103 = por %p101, %p102
      %p105 = scmp.ne.s32.totalorder %s90, %s104
      %p106 = scmp.eq.s32.totalorder %s19, 0
      %p107 = por %p105, %p106
      %s108 = ssub.s32 %s20, %s32
      %p109 = scmp.eq.s32.totalorder %s108, 0
      %s111 = sadd.s32 %s110, 1
      %s112 = scalar_select %p109, %s110, %s111
      %p115 = pneg %p109
      %p116 = scmp.eq.s32.totalorder %s13, 5
      %p117 = por %p115, %p116
      %p118 = scmp.ne.s32.totalorder %s110, %s113
      %p119 = scmp.eq.s32.totalorder %s13, 0
      %p120 = por %p118, %p119
      %p121 = scmp.ne.s32.totalorder %s110, %s113
      %p122 = scmp.eq.s32.totalorder %s18, 5
      %p123 = por %p121, %p122
      %p124 = scmp.ne.s32.totalorder %s113, %s114
      %p125 = scmp.eq.s32.totalorder %s18, 0
      %p126 = por %p124, %p125
      %p127 = scmp.ne.s32.totalorder %s113, %s114
      %p128 = scmp.eq.s32.totalorder %s19, 5
      %p129 = por %p127, %p128
      %p131 = scmp.ne.s32.totalorder %s114, %s130
      %p132 = scmp.eq.s32.totalorder %s19, 0
      %p133 = por %p131, %p132
      %p134 = scmp.le.s32.totalorder 1, %s13
      %p135 = scmp.lt.s32.totalorder %s13, 7
      %p136 = pnand %p134, %p135
      %p137 = pneg %p136
      // Predicated region
      $region9: #{tpu_custom_call.1} parent=5 // pred_check
        _
      $region10: #{tpu_custom_call.1} parent=5 // pred_check_branch
        %139 = sbr.rel (%p136) target = $region12
      $region11: #{tpu_custom_call.1} parent=5 // pred_region
        %s140 = ssub.s32 %s13, 1
        // Predicated region
        $region13: #{tpu_custom_call.1} parent=11 // pred_check
          %p141 = pneg %p100
        $region14: #{tpu_custom_call.1} parent=11 // pred_check_branch
          %143 = sbr.rel (%p141) target = $region16
        $region15: #{tpu_custom_call.1} parent=11 // pred_region
          %145 = vsyncadd [#allocation6], 0
          %s147 = sshll.u32 %s2, 4
          %s148 = int_to_ptr.hbm [resolvable:$true] %s147
          %s149 = sshll.u32 [#allocation5], 4
          %s150 = int_to_ptr.vmem [resolvable:$true] %s149
          %152 = dma.hbm_to_vmem [thread:$0]  %s148, 16, %s150, [#allocation6]
        $region16: #{tpu_custom_call.1} parent=11 // pred_fallthru
          _
      $region12: #{tpu_custom_call.1} parent=5 // pred_fallthru
        _
      %p153 = scmp.lt.s32.totalorder %s13, 6
      // Predicated region
      $region17: #{tpu_custom_call.1} parent=5 // pred_check
        %p154 = pneg %p153
      $region18: #{tpu_custom_call.1} parent=5 // pred_check_branch
        %156 = sbr.rel (%p154) target = $region20
      $region19: #{tpu_custom_call.1} parent=5 // pred_region
        // Predicated region
        $region21: #{tpu_custom_call.1} parent=19 // pred_check
          %p157 = pneg %p47
        $region22: #{tpu_custom_call.1} parent=19 // pred_check_branch
          %159 = sbr.rel (%p157) target = $region24
        $region23: #{tpu_custom_call.1} parent=19 // pred_region
          %s160 = sand.u32 %s37, 1
          %s161 = scalar_lea.sflag [#allocation4], %s160
          %s162 = sand.u32 %s37, 1
          %s163 = smul.addr %s162, 1024
          %s164 = scalar_lea.vmem [#allocation3], %s163
          %s165 = smul.u32 32, %s20
          %s166 = smul.u32 8, %s21
          %168 = vsyncadd %s161, 0
          %s169 = smul.addr %s165, 24
          %s170 = sadd.s32 %s166, %s169
          %s171 = smul.addr %s170, 4
          %s172 = scalar_lea.hbm %s0, %s171
          %s173 = sshll.u32 %s172, 4
          %s174 = int_to_ptr.hbm [resolvable:$true] %s173
          %s175 = sshll.u32 %s164, 4
          %s176 = int_to_ptr.vmem [resolvable:$true] %s175
          %181 = dma.hbm_to_vmem [thread:$0]  %s174, 16384, %s176, %s161, 1536, 512, 32
        $region24: #{tpu_custom_call.1} parent=19 // pred_fallthru
          _
        // Predicated region
        $region25: #{tpu_custom_call.1} parent=19 // pred_check
          %p182 = pneg %p73
        $region26: #{tpu_custom_call.1} parent=19 // pred_check_branch
          %184 = sbr.rel (%p182) target = $region28
        $region27: #{tpu_custom_call.1} parent=19 // pred_region
          %s185 = smul.u32 128, %s21
          %p186 = scmp.lt.s32.totalorder %s185, 383
          %s187 = scalar_select %p186, %s185, 383
          %s188 = smul.addr %s187, 4
          %s189 = scalar_lea.vmem %s1, %s188
          %s190 = smul.u32 128, %s21
        $region28: #{tpu_custom_call.1} parent=19 // pred_fallthru
          _
      $region20: #{tpu_custom_call.1} parent=5 // pred_fallthru
        _
      %p191 = scmp.le.s32.totalorder 1, %s13
      %p192 = scmp.lt.s32.totalorder %s13, 7
      %p193 = pnand %p191, %p192
      %p194 = pneg %p193
      // Predicated region
      $region29: #{tpu_custom_call.1} parent=5 // pred_check
        _
      $region30: #{tpu_custom_call.1} parent=5 // pred_check_branch
        %196 = sbr.rel (%p193) target = $region32
      $region31: #{tpu_custom_call.1} parent=5 // pred_region
        %s197 = ssub.s32 %s13, 1
        %s198 = sand.u32 %s40, 1
        %s199 = scalar_lea.sflag [#allocation4], %s198
        %s200 = sand.u32 %s40, 1
        %s201 = smul.addr %s200, 1024
        %s202 = scalar_lea.vmem [#allocation3], %s201
        // Predicated region
        $region33: #{tpu_custom_call.1} parent=31 // pred_check
          %p203 = pneg %p53
        $region34: #{tpu_custom_call.1} parent=31 // pred_check_branch
          %205 = sbr.rel (%p203) target = $region36
        $region35: #{tpu_custom_call.1} parent=31 // pred_region
          %207 = dma.done %s199, 16384
        $region36: #{tpu_custom_call.1} parent=31 // pred_fallthru
          _
        // Predicated region
        $region37: #{tpu_custom_call.1} parent=31 // pred_check
          %p208 = pneg %p100
        $region38: #{tpu_custom_call.1} parent=31 // pred_check_branch
          %210 = sbr.rel (%p208) target = $region40
        $region39: #{tpu_custom_call.1} parent=31 // pred_region
          %212 = dma.done [#allocation6], 16
        $region40: #{tpu_custom_call.1} parent=31 // pred_fallthru
          _
        %s213 = sand.u32 %s40, 1
        %s214 = scalar_lea.sflag [#allocation4], %s213
        %s215 = sand.u32 %s40, 1
        %s216 = smul.addr %s215, 1024
        %s217 = scalar_lea.vmem [#allocation3], %s216
        %p218 = pneg %p53
        %p219 = pneg %p50
        %s220 = smul.u32 128, %s23
        %p221 = scmp.lt.s32.totalorder %s220, 383
        %s222 = scalar_select %p221, %s220, 383
        %s223 = smul.addr %s222, 4
        %s224 = scalar_lea.vmem %s1, %s223
        %p225 = pneg %p79
        %p226 = pneg %p76
        %p227 = pneg %p100
        %p228 = pneg %p97
        %p229 = pneg %p126
        %p230 = pneg %p123
        %s231 = smul.u32 32, %s22
        %p232 = scmp.lt.s32.totalorder %s231, 63
        %s233 = scalar_select %p232, %s231, 63
        %s234 = smul.addr %s233, 4
        %s235 = scalar_lea.vmem %s3, %s234
        %s236 = smul.u32 32, %s22
        %s237 = smul.u32 8, %s23
        %s238 = smul.u32 128, %s23
        %p239 = scmp.lt.s32.totalorder %s238, 383
        %s240 = scalar_select %p239, %s238, 383
        %s241 = smul.addr %s240, 4
        %s242 = scalar_lea.vmem %s1, %s241
        %s243 = smul.u32 128, %s23
        %s244 = smul.u32 32, %s22
        %p245 = scmp.lt.s32.totalorder %s244, 63
        %s246 = scalar_select %p245, %s244, 63
        %s247 = smul.addr %s246, 4
        %s248 = scalar_lea.vmem %s3, %s247
        %s249 = smul.u32 32, %s22
        %p250 = scmp.eq.s32.totalorder %s23, 0
        // Predicated region
        $region41: #{tpu_custom_call.1} parent=31 // pred_check
          %p251 = pneg %p250
        $region42: #{tpu_custom_call.1} parent=31 // pred_check_branch
          %253 = sbr.rel (%p251) target = $region44
        $region43: #{tpu_custom_call.1} parent=31 // pred_region
          %vm254 = vcmask 785408
          %255 = vst.msk [vmem:[#allocation2] sm:$0xff] %vm254, 0.0
          %256 = vst.msk [vmem:[#allocation2 + $0x8] sm:$0xff] %vm254, 0.0
          %257 = vst.msk [vmem:[#allocation2 + $0x10] sm:$0xff] %vm254, 0.0
          %258 = vst.msk [vmem:[#allocation2 + $0x18] sm:$0xff] %vm254, 0.0
          %259 = vst.msk [vmem:[#allocation2 + $0x20] sm:$0xff] %vm254, 0.0
          %260 = vst.msk [vmem:[#allocation2 + $0x28] sm:$0xff] %vm254, 0.0
          %261 = vst.msk [vmem:[#allocation2 + $0x30] sm:$0xff] %vm254, 0.0
          %262 = vst.msk [vmem:[#allocation2 + $0x38] sm:$0xff] %vm254, 0.0
          %263 = vst.msk [vmem:[#allocation2 + $0x40] sm:$0xff] %vm254, 0.0
          %264 = vst.msk [vmem:[#allocation2 + $0x48] sm:$0xff] %vm254, 0.0
          %265 = vst.msk [vmem:[#allocation2 + $0x50] sm:$0xff] %vm254, 0.0
          %266 = vst.msk [vmem:[#allocation2 + $0x58] sm:$0xff] %vm254, 0.0
          %267 = vst.msk [vmem:[#allocation2 + $0x60] sm:$0xff] %vm254, 0.0
          %268 = vst.msk [vmem:[#allocation2 + $0x68] sm:$0xff] %vm254, 0.0
          %269 = vst.msk [vmem:[#allocation2 + $0x70] sm:$0xff] %vm254, 0.0
          %270 = vst.msk [vmem:[#allocation2 + $0x78] sm:$0xff] %vm254, 0.0
          %271 = vst.msk [vmem:[#allocation2 + $0x80] sm:$0xff] %vm254, 0.0
          %272 = vst.msk [vmem:[#allocation2 + $0x88] sm:$0xff] %vm254, 0.0
          %273 = vst.msk [vmem:[#allocation2 + $0x90] sm:$0xff] %vm254, 0.0
          %274 = vst.msk [vmem:[#allocation2 + $0x98] sm:$0xff] %vm254, 0.0
          %275 = vst.msk [vmem:[#allocation2 + $0xa0] sm:$0xff] %vm254, 0.0
          %276 = vst.msk [vmem:[#allocation2 + $0xa8] sm:$0xff] %vm254, 0.0
          %277 = vst.msk [vmem:[#allocation2 + $0xb0] sm:$0xff] %vm254, 0.0
          %278 = vst.msk [vmem:[#allocation2 + $0xb8] sm:$0xff] %vm254, 0.0
          %279 = vst.msk [vmem:[#allocation2 + $0xc0] sm:$0xff] %vm254, 0.0
          %280 = vst.msk [vmem:[#allocation2 + $0xc8] sm:$0xff] %vm254, 0.0
          %281 = vst.msk [vmem:[#allocation2 + $0xd0] sm:$0xff] %vm254, 0.0
          %282 = vst.msk [vmem:[#allocation2 + $0xd8] sm:$0xff] %vm254, 0.0
          %283 = vst.msk [vmem:[#allocation2 + $0xe0] sm:$0xff] %vm254, 0.0
          %284 = vst.msk [vmem:[#allocation2 + $0xe8] sm:$0xff] %vm254, 0.0
          %285 = vst.msk [vmem:[#allocation2 + $0xf0] sm:$0xff] %vm254, 0.0
          %286 = vst.msk [vmem:[#allocation2 + $0xf8] sm:$0xff] %vm254, 0.0
        $region44: #{tpu_custom_call.1} parent=31 // pred_fallthru
          _
        %v287 = vld [vmem:[#allocation2] sm:$0xff]
        %v288 = vld [vmem:[#allocation2 + $0x8] sm:$0xff]
        %v289 = vld [vmem:[#allocation2 + $0x10] sm:$0xff]
        %v290 = vld [vmem:[#allocation2 + $0x18] sm:$0xff]
        %v291 = vld [vmem:[#allocation2 + $0x20] sm:$0xff]
        %v292 = vld [vmem:[#allocation2 + $0x28] sm:$0xff]
        %v293 = vld [vmem:[#allocation2 + $0x30] sm:$0xff]
        %v294 = vld [vmem:[#allocation2 + $0x38] sm:$0xff]
        %v295 = vld [vmem:[#allocation2 + $0x40] sm:$0xff]
        %v296 = vld [vmem:[#allocation2 + $0x48] sm:$0xff]
        %v297 = vld [vmem:[#allocation2 + $0x50] sm:$0xff]
        %v298 = vld [vmem:[#allocation2 + $0x58] sm:$0xff]
        %v299 = vld [vmem:[#allocation2 + $0x60] sm:$0xff]
        %v300 = vld [vmem:[#allocation2 + $0x68] sm:$0xff]
        %v301 = vld [vmem:[#allocation2 + $0x70] sm:$0xff]
        %v302 = vld [vmem:[#allocation2 + $0x78] sm:$0xff]
        %v303 = vld [vmem:[#allocation2 + $0x80] sm:$0xff]
        %v304 = vld [vmem:[#allocation2 + $0x88] sm:$0xff]
        %v305 = vld [vmem:[#allocation2 + $0x90] sm:$0xff]
        %v306 = vld [vmem:[#allocation2 + $0x98] sm:$0xff]
        %v307 = vld [vmem:[#allocation2 + $0xa0] sm:$0xff]
        %v308 = vld [vmem:[#allocation2 + $0xa8] sm:$0xff]
        %v309 = vld [vmem:[#allocation2 + $0xb0] sm:$0xff]
        %v310 = vld [vmem:[#allocation2 + $0xb8] sm:$0xff]
        %v311 = vld [vmem:[#allocation2 + $0xc0] sm:$0xff]
        %v312 = vld [vmem:[#allocation2 + $0xc8] sm:$0xff]
        %v313 = vld [vmem:[#allocation2 + $0xd0] sm:$0xff]
        %v314 = vld [vmem:[#allocation2 + $0xd8] sm:$0xff]
        %v315 = vld [vmem:[#allocation2 + $0xe0] sm:$0xff]
        %v316 = vld [vmem:[#allocation2 + $0xe8] sm:$0xff]
        %v317 = vld [vmem:[#allocation2 + $0xf0] sm:$0xff]
        %v318 = vld [vmem:[#allocation2 + $0xf8] sm:$0xff]
        %v319 = vld [vmem:[%s202] sm:$0xff]
        %v320 = vld [vmem:[%s202 + $0x8] sm:$0xff]
        %v321 = vld [vmem:[%s202 + $0x10] sm:$0xff]
        %v322 = vld [vmem:[%s202 + $0x18] sm:$0xff]
        %v323 = vld [vmem:[%s202 + $0x20] sm:$0xff]
        %v324 = vld [vmem:[%s202 + $0x28] sm:$0xff]
        %v325 = vld [vmem:[%s202 + $0x30] sm:$0xff]
        %v326 = vld [vmem:[%s202 + $0x38] sm:$0xff]
        %v327 = vld [vmem:[%s202 + $0x40] sm:$0xff]
        %v328 = vld [vmem:[%s202 + $0x48] sm:$0xff]
        %v329 = vld [vmem:[%s202 + $0x50] sm:$0xff]
        %v330 = vld [vmem:[%s202 + $0x58] sm:$0xff]
        %v331 = vld [vmem:[%s202 + $0x60] sm:$0xff]
        %v332 = vld [vmem:[%s202 + $0x68] sm:$0xff]
        %v333 = vld [vmem:[%s202 + $0x70] sm:$0xff]
        %v334 = vld [vmem:[%s202 + $0x78] sm:$0xff]
        %v335 = vld [vmem:[%s202 + $0x80] sm:$0xff]
        %v336 = vld [vmem:[%s202 + $0x88] sm:$0xff]
        %v337 = vld [vmem:[%s202 + $0x90] sm:$0xff]
        %v338 = vld [vmem:[%s202 + $0x98] sm:$0xff]
        %v339 = vld [vmem:[%s202 + $0xa0] sm:$0xff]
        %v340 = vld [vmem:[%s202 + $0xa8] sm:$0xff]
        %v341 = vld [vmem:[%s202 + $0xb0] sm:$0xff]
        %v342 = vld [vmem:[%s202 + $0xb8] sm:$0xff]
        %v343 = vld [vmem:[%s202 + $0xc0] sm:$0xff]
        %v344 = vld [vmem:[%s202 + $0xc8] sm:$0xff]
        %v345 = vld [vmem:[%s202 + $0xd0] sm:$0xff]
        %v346 = vld [vmem:[%s202 + $0xd8] sm:$0xff]
        %v347 = vld [vmem:[%s202 + $0xe0] sm:$0xff]
        %v348 = vld [vmem:[%s202 + $0xe8] sm:$0xff]
        %v349 = vld [vmem:[%s202 + $0xf0] sm:$0xff]
        %v350 = vld [vmem:[%s202 + $0xf8] sm:$0xff]
        %v351 = vld [vmem:[%s202 + $0x100] sm:$0xff]
        %v352 = vld [vmem:[%s202 + $0x108] sm:$0xff]
        %v353 = vld [vmem:[%s202 + $0x110] sm:$0xff]
        %v354 = vld [vmem:[%s202 + $0x118] sm:$0xff]
        %v355 = vld [vmem:[%s202 + $0x120] sm:$0xff]
        %v356 = vld [vmem:[%s202 + $0x128] sm:$0xff]
        %v357 = vld [vmem:[%s202 + $0x130] sm:$0xff]
        %v358 = vld [vmem:[%s202 + $0x138] sm:$0xff]
        %v359 = vld [vmem:[%s202 + $0x140] sm:$0xff]
        %v360 = vld [vmem:[%s202 + $0x148] sm:$0xff]
        %v361 = vld [vmem:[%s202 + $0x150] sm:$0xff]
        %v362 = vld [vmem:[%s202 + $0x158] sm:$0xff]
        %v363 = vld [vmem:[%s202 + $0x160] sm:$0xff]
        %v364 = vld [vmem:[%s202 + $0x168] sm:$0xff]
        %v365 = vld [vmem:[%s202 + $0x170] sm:$0xff]
        %v366 = vld [vmem:[%s202 + $0x178] sm:$0xff]
        %v367 = vld [vmem:[%s202 + $0x180] sm:$0xff]
        %v368 = vld [vmem:[%s202 + $0x188] sm:$0xff]
        %v369 = vld [vmem:[%s202 + $0x190] sm:$0xff]
        %v370 = vld [vmem:[%s202 + $0x198] sm:$0xff]
        %v371 = vld [vmem:[%s202 + $0x1a0] sm:$0xff]
        %v372 = vld [vmem:[%s202 + $0x1a8] sm:$0xff]
        %v373 = vld [vmem:[%s202 + $0x1b0] sm:$0xff]
        %v374 = vld [vmem:[%s202 + $0x1b8] sm:$0xff]
        %v375 = vld [vmem:[%s202 + $0x1c0] sm:$0xff]
        %v376 = vld [vmem:[%s202 + $0x1c8] sm:$0xff]
        %v377 = vld [vmem:[%s202 + $0x1d0] sm:$0xff]
        %v378 = vld [vmem:[%s202 + $0x1d8] sm:$0xff]
        %v379 = vld [vmem:[%s202 + $0x1e0] sm:$0xff]
        %v380 = vld [vmem:[%s202 + $0x1e8] sm:$0xff]
        %v381 = vld [vmem:[%s202 + $0x1f0] sm:$0xff]
        %v382 = vld [vmem:[%s202 + $0x1f8] sm:$0xff]
        %v383 = vld [vmem:[%s202 + $0x200] sm:$0xff]
        %v384 = vld [vmem:[%s202 + $0x208] sm:$0xff]
        %v385 = vld [vmem:[%s202 + $0x210] sm:$0xff]
        %v386 = vld [vmem:[%s202 + $0x218] sm:$0xff]
        %v387 = vld [vmem:[%s202 + $0x220] sm:$0xff]
        %v388 = vld [vmem:[%s202 + $0x228] sm:$0xff]
        %v389 = vld [vmem:[%s202 + $0x230] sm:$0xff]
        %v390 = vld [vmem:[%s202 + $0x238] sm:$0xff]
        %v391 = vld [vmem:[%s202 + $0x240] sm:$0xff]
        %v392 = vld [vmem:[%s202 + $0x248] sm:$0xff]
        %v393 = vld [vmem:[%s202 + $0x250] sm:$0xff]
        %v394 = vld [vmem:[%s202 + $0x258] sm:$0xff]
        %v395 = vld [vmem:[%s202 + $0x260] sm:$0xff]
        %v396 = vld [vmem:[%s202 + $0x268] sm:$0xff]
        %v397 = vld [vmem:[%s202 + $0x270] sm:$0xff]
        %v398 = vld [vmem:[%s202 + $0x278] sm:$0xff]
        %v399 = vld [vmem:[%s202 + $0x280] sm:$0xff]
        %v400 = vld [vmem:[%s202 + $0x288] sm:$0xff]
        %v401 = vld [vmem:[%s202 + $0x290] sm:$0xff]
        %v402 = vld [vmem:[%s202 + $0x298] sm:$0xff]
        %v403 = vld [vmem:[%s202 + $0x2a0] sm:$0xff]
        %v404 = vld [vmem:[%s202 + $0x2a8] sm:$0xff]
        %v405 = vld [vmem:[%s202 + $0x2b0] sm:$0xff]
        %v406 = vld [vmem:[%s202 + $0x2b8] sm:$0xff]
        %v407 = vld [vmem:[%s202 + $0x2c0] sm:$0xff]
        %v408 = vld [vmem:[%s202 + $0x2c8] sm:$0xff]
        %v409 = vld [vmem:[%s202 + $0x2d0] sm:$0xff]
        %v410 = vld [vmem:[%s202 + $0x2d8] sm:$0xff]
        %v411 = vld [vmem:[%s202 + $0x2e0] sm:$0xff]
        %v412 = vld [vmem:[%s202 + $0x2e8] sm:$0xff]
        %v413 = vld [vmem:[%s202 + $0x2f0] sm:$0xff]
        %v414 = vld [vmem:[%s202 + $0x2f8] sm:$0xff]
        %v415 = vld [vmem:[%s202 + $0x300] sm:$0xff]
        %v416 = vld [vmem:[%s202 + $0x308] sm:$0xff]
        %v417 = vld [vmem:[%s202 + $0x310] sm:$0xff]
        %v418 = vld [vmem:[%s202 + $0x318] sm:$0xff]
        %v419 = vld [vmem:[%s202 + $0x320] sm:$0xff]
        %v420 = vld [vmem:[%s202 + $0x328] sm:$0xff]
        %v421 = vld [vmem:[%s202 + $0x330] sm:$0xff]
        %v422 = vld [vmem:[%s202 + $0x338] sm:$0xff]
        %v423 = vld [vmem:[%s202 + $0x340] sm:$0xff]
        %v424 = vld [vmem:[%s202 + $0x348] sm:$0xff]
        %v425 = vld [vmem:[%s202 + $0x350] sm:$0xff]
        %v426 = vld [vmem:[%s202 + $0x358] sm:$0xff]
        %v427 = vld [vmem:[%s202 + $0x360] sm:$0xff]
        %v428 = vld [vmem:[%s202 + $0x368] sm:$0xff]
        %v429 = vld [vmem:[%s202 + $0x370] sm:$0xff]
        %v430 = vld [vmem:[%s202 + $0x378] sm:$0xff]
        %v431 = vld [vmem:[%s202 + $0x380] sm:$0xff]
        %v432 = vld [vmem:[%s202 + $0x388] sm:$0xff]
        %v433 = vld [vmem:[%s202 + $0x390] sm:$0xff]
        %v434 = vld [vmem:[%s202 + $0x398] sm:$0xff]
        %v435 = vld [vmem:[%s202 + $0x3a0] sm:$0xff]
        %v436 = vld [vmem:[%s202 + $0x3a8] sm:$0xff]
        %v437 = vld [vmem:[%s202 + $0x3b0] sm:$0xff]
        %v438 = vld [vmem:[%s202 + $0x3b8] sm:$0xff]
        %v439 = vld [vmem:[%s202 + $0x3c0] sm:$0xff]
        %v440 = vld [vmem:[%s202 + $0x3c8] sm:$0xff]
        %v441 = vld [vmem:[%s202 + $0x3d0] sm:$0xff]
        %v442 = vld [vmem:[%s202 + $0x3d8] sm:$0xff]
        %v443 = vld [vmem:[%s202 + $0x3e0] sm:$0xff]
        %v444 = vld [vmem:[%s202 + $0x3e8] sm:$0xff]
        %v445 = vld [vmem:[%s202 + $0x3f0] sm:$0xff]
        %v446 = vld [vmem:[%s202 + $0x3f8] sm:$0xff]
        %v447 = vld [vmem:[%s242] sm:$0xf]
        %v448 = vld [vmem:[%s242 + $0x4] sm:$0xf]
        %v449 = vld [vmem:[%s242 + $0x8] sm:$0xf]
        %v450 = vld [vmem:[%s242 + $0xc] sm:$0xf]
        %v451 = vld [vmem:[%s242 + $0x10] sm:$0xf]
        %v452 = vld [vmem:[%s242 + $0x14] sm:$0xf]
        %v453 = vld [vmem:[%s242 + $0x18] sm:$0xf]
        %v454 = vld [vmem:[%s242 + $0x1c] sm:$0xf]
        %v455 = vld [vmem:[%s242 + $0x20] sm:$0xf]
        %v456 = vld [vmem:[%s242 + $0x24] sm:$0xf]
        %v457 = vld [vmem:[%s242 + $0x28] sm:$0xf]
        %v458 = vld [vmem:[%s242 + $0x2c] sm:$0xf]
        %v459 = vld [vmem:[%s242 + $0x30] sm:$0xf]
        %v460 = vld [vmem:[%s242 + $0x34] sm:$0xf]
        %v461 = vld [vmem:[%s242 + $0x38] sm:$0xf]
        %v462 = vld [vmem:[%s242 + $0x3c] sm:$0xf]
        %v463 = vld [vmem:[%s242 + $0x40] sm:$0xf]
        %v464 = vld [vmem:[%s242 + $0x44] sm:$0xf]
        %v465 = vld [vmem:[%s242 + $0x48] sm:$0xf]
        %v466 = vld [vmem:[%s242 + $0x4c] sm:$0xf]
        %v467 = vld [vmem:[%s242 + $0x50] sm:$0xf]
        %v468 = vld [vmem:[%s242 + $0x54] sm:$0xf]
        %v469 = vld [vmem:[%s242 + $0x58] sm:$0xf]
        %v470 = vld [vmem:[%s242 + $0x5c] sm:$0xf]
        %v471 = vld [vmem:[%s242 + $0x60] sm:$0xf]
        %v472 = vld [vmem:[%s242 + $0x64] sm:$0xf]
        %v473 = vld [vmem:[%s242 + $0x68] sm:$0xf]
        %v474 = vld [vmem:[%s242 + $0x6c] sm:$0xf]
        %v475 = vld [vmem:[%s242 + $0x70] sm:$0xf]
        %v476 = vld [vmem:[%s242 + $0x74] sm:$0xf]
        %v477 = vld [vmem:[%s242 + $0x78] sm:$0xf]
        %v478 = vld [vmem:[%s242 + $0x7c] sm:$0xf]
        %v479 = vld [vmem:[%s242 + $0x80] sm:$0xf]
        %v480 = vld [vmem:[%s242 + $0x84] sm:$0xf]
        %v481 = vld [vmem:[%s242 + $0x88] sm:$0xf]
        %v482 = vld [vmem:[%s242 + $0x8c] sm:$0xf]
        %v483 = vld [vmem:[%s242 + $0x90] sm:$0xf]
        %v484 = vld [vmem:[%s242 + $0x94] sm:$0xf]
        %v485 = vld [vmem:[%s242 + $0x98] sm:$0xf]
        %v486 = vld [vmem:[%s242 + $0x9c] sm:$0xf]
        %v487 = vld [vmem:[%s242 + $0xa0] sm:$0xf]
        %v488 = vld [vmem:[%s242 + $0xa4] sm:$0xf]
        %v489 = vld [vmem:[%s242 + $0xa8] sm:$0xf]
        %v490 = vld [vmem:[%s242 + $0xac] sm:$0xf]
        %v491 = vld [vmem:[%s242 + $0xb0] sm:$0xf]
        %v492 = vld [vmem:[%s242 + $0xb4] sm:$0xf]
        %v493 = vld [vmem:[%s242 + $0xb8] sm:$0xf]
        %v494 = vld [vmem:[%s242 + $0xbc] sm:$0xf]
        %v495 = vld [vmem:[%s242 + $0xc0] sm:$0xf]
        %v496 = vld [vmem:[%s242 + $0xc4] sm:$0xf]
        %v497 = vld [vmem:[%s242 + $0xc8] sm:$0xf]
        %v498 = vld [vmem:[%s242 + $0xcc] sm:$0xf]
        %v499 = vld [vmem:[%s242 + $0xd0] sm:$0xf]
        %v500 = vld [vmem:[%s242 + $0xd4] sm:$0xf]
        %v501 = vld [vmem:[%s242 + $0xd8] sm:$0xf]
        %v502 = vld [vmem:[%s242 + $0xdc] sm:$0xf]
        %v503 = vld [vmem:[%s242 + $0xe0] sm:$0xf]
        %v504 = vld [vmem:[%s242 + $0xe4] sm:$0xf]
        %v505 = vld [vmem:[%s242 + $0xe8] sm:$0xf]
        %v506 = vld [vmem:[%s242 + $0xec] sm:$0xf]
        %v507 = vld [vmem:[%s242 + $0xf0] sm:$0xf]
        %v508 = vld [vmem:[%s242 + $0xf4] sm:$0xf]
        %v509 = vld [vmem:[%s242 + $0xf8] sm:$0xf]
        %v510 = vld [vmem:[%s242 + $0xfc] sm:$0xf]
        %v511 = vld [vmem:[%s242 + $0x100] sm:$0xf]
        %v512 = vld [vmem:[%s242 + $0x104] sm:$0xf]
        %v513 = vld [vmem:[%s242 + $0x108] sm:$0xf]
        %v514 = vld [vmem:[%s242 + $0x10c] sm:$0xf]
        %v515 = vld [vmem:[%s242 + $0x110] sm:$0xf]
        %v516 = vld [vmem:[%s242 + $0x114] sm:$0xf]
        %v517 = vld [vmem:[%s242 + $0x118] sm:$0xf]
        %v518 = vld [vmem:[%s242 + $0x11c] sm:$0xf]
        %v519 = vld [vmem:[%s242 + $0x120] sm:$0xf]
        %v520 = vld [vmem:[%s242 + $0x124] sm:$0xf]
        %v521 = vld [vmem:[%s242 + $0x128] sm:$0xf]
        %v522 = vld [vmem:[%s242 + $0x12c] sm:$0xf]
        %v523 = vld [vmem:[%s242 + $0x130] sm:$0xf]
        %v524 = vld [vmem:[%s242 + $0x134] sm:$0xf]
        %v525 = vld [vmem:[%s242 + $0x138] sm:$0xf]
        %v526 = vld [vmem:[%s242 + $0x13c] sm:$0xf]
        %v527 = vld [vmem:[%s242 + $0x140] sm:$0xf]
        %v528 = vld [vmem:[%s242 + $0x144] sm:$0xf]
        %v529 = vld [vmem:[%s242 + $0x148] sm:$0xf]
        %v530 = vld [vmem:[%s242 + $0x14c] sm:$0xf]
        %v531 = vld [vmem:[%s242 + $0x150] sm:$0xf]
        %v532 = vld [vmem:[%s242 + $0x154] sm:$0xf]
        %v533 = vld [vmem:[%s242 + $0x158] sm:$0xf]
        %v534 = vld [vmem:[%s242 + $0x15c] sm:$0xf]
        %v535 = vld [vmem:[%s242 + $0x160] sm:$0xf]
        %v536 = vld [vmem:[%s242 + $0x164] sm:$0xf]
        %v537 = vld [vmem:[%s242 + $0x168] sm:$0xf]
        %v538 = vld [vmem:[%s242 + $0x16c] sm:$0xf]
        %v539 = vld [vmem:[%s242 + $0x170] sm:$0xf]
        %v540 = vld [vmem:[%s242 + $0x174] sm:$0xf]
        %v541 = vld [vmem:[%s242 + $0x178] sm:$0xf]
        %v542 = vld [vmem:[%s242 + $0x17c] sm:$0xf]
        %v543 = vld [vmem:[%s242 + $0x180] sm:$0xf]
        %v544 = vld [vmem:[%s242 + $0x184] sm:$0xf]
        %v545 = vld [vmem:[%s242 + $0x188] sm:$0xf]
        %v546 = vld [vmem:[%s242 + $0x18c] sm:$0xf]
        %v547 = vld [vmem:[%s242 + $0x190] sm:$0xf]
        %v548 = vld [vmem:[%s242 + $0x194] sm:$0xf]
        %v549 = vld [vmem:[%s242 + $0x198] sm:$0xf]
        %v550 = vld [vmem:[%s242 + $0x19c] sm:$0xf]
        %v551 = vld [vmem:[%s242 + $0x1a0] sm:$0xf]
        %v552 = vld [vmem:[%s242 + $0x1a4] sm:$0xf]
        %v553 = vld [vmem:[%s242 + $0x1a8] sm:$0xf]
        %v554 = vld [vmem:[%s242 + $0x1ac] sm:$0xf]
        %v555 = vld [vmem:[%s242 + $0x1b0] sm:$0xf]
        %v556 = vld [vmem:[%s242 + $0x1b4] sm:$0xf]
        %v557 = vld [vmem:[%s242 + $0x1b8] sm:$0xf]
        %v558 = vld [vmem:[%s242 + $0x1bc] sm:$0xf]
        %v559 = vld [vmem:[%s242 + $0x1c0] sm:$0xf]
        %v560 = vld [vmem:[%s242 + $0x1c4] sm:$0xf]
        %v561 = vld [vmem:[%s242 + $0x1c8] sm:$0xf]
        %v562 = vld [vmem:[%s242 + $0x1cc] sm:$0xf]
        %v563 = vld [vmem:[%s242 + $0x1d0] sm:$0xf]
        %v564 = vld [vmem:[%s242 + $0x1d4] sm:$0xf]
        %v565 = vld [vmem:[%s242 + $0x1d8] sm:$0xf]
        %v566 = vld [vmem:[%s242 + $0x1dc] sm:$0xf]
        %v567 = vld [vmem:[%s242 + $0x1e0] sm:$0xf]
        %v568 = vld [vmem:[%s242 + $0x1e4] sm:$0xf]
        %v569 = vld [vmem:[%s242 + $0x1e8] sm:$0xf]
        %v570 = vld [vmem:[%s242 + $0x1ec] sm:$0xf]
        %v571 = vld [vmem:[%s242 + $0x1f0] sm:$0xf]
        %v572 = vld [vmem:[%s242 + $0x1f4] sm:$0xf]
        %v573 = vld [vmem:[%s242 + $0x1f8] sm:$0xf]
        %v574 = vld [vmem:[%s242 + $0x1fc] sm:$0xf]
        %v703 = vunpack.c.l.b16 %v319
        %v704 = vunpack.c.h.b16 %v319
        %v705 = vunpack.c.l.b16 %v320
        %v706 = vunpack.c.h.b16 %v320
        %v707 = vunpack.c.l.b16 %v321
        %v708 = vunpack.c.h.b16 %v321
        %v709 = vunpack.c.l.b16 %v322
        %v710 = vunpack.c.h.b16 %v322
        %v711 = vunpack.c.l.b16 %v323
        %v712 = vunpack.c.h.b16 %v323
        %v713 = vunpack.c.l.b16 %v324
        %v714 = vunpack.c.h.b16 %v324
        %v715 = vunpack.c.l.b16 %v325
        %v716 = vunpack.c.h.b16 %v325
        %v717 = vunpack.c.l.b16 %v326
        %v718 = vunpack.c.h.b16 %v326
        %v719 = vunpack.c.l.b16 %v327
        %v720 = vunpack.c.h.b16 %v327
        %v721 = vunpack.c.l.b16 %v328
        %v722 = vunpack.c.h.b16 %v328
        %v723 = vunpack.c.l.b16 %v329
        %v724 = vunpack.c.h.b16 %v329
        %v725 = vunpack.c.l.b16 %v330
        %v726 = vunpack.c.h.b16 %v330
        %v727 = vunpack.c.l.b16 %v331
        %v728 = vunpack.c.h.b16 %v331
        %v729 = vunpack.c.l.b16 %v332
        %v730 = vunpack.c.h.b16 %v332
        %v731 = vunpack.c.l.b16 %v333
        %v732 = vunpack.c.h.b16 %v333
        %v733 = vunpack.c.l.b16 %v334
        %v734 = vunpack.c.h.b16 %v334
        %v735 = vunpack.c.l.b16 %v335
        %v736 = vunpack.c.h.b16 %v335
        %v737 = vunpack.c.l.b16 %v336
        %v738 = vunpack.c.h.b16 %v336
        %v739 = vunpack.c.l.b16 %v337
        %v740 = vunpack.c.h.b16 %v337
        %v741 = vunpack.c.l.b16 %v338
        %v742 = vunpack.c.h.b16 %v338
        %v743 = vunpack.c.l.b16 %v339
        %v744 = vunpack.c.h.b16 %v339
        %v745 = vunpack.c.l.b16 %v340
        %v746 = vunpack.c.h.b16 %v340
        %v747 = vunpack.c.l.b16 %v341
        %v748 = vunpack.c.h.b16 %v341
        %v749 = vunpack.c.l.b16 %v342
        %v750 = vunpack.c.h.b16 %v342
        %v751 = vunpack.c.l.b16 %v343
        %v752 = vunpack.c.h.b16 %v343
        %v753 = vunpack.c.l.b16 %v344
        %v754 = vunpack.c.h.b16 %v344
        %v755 = vunpack.c.l.b16 %v345
        %v756 = vunpack.c.h.b16 %v345
        %v757 = vunpack.c.l.b16 %v346
        %v758 = vunpack.c.h.b16 %v346
        %v759 = vunpack.c.l.b16 %v347
        %v760 = vunpack.c.h.b16 %v347
        %v761 = vunpack.c.l.b16 %v348
        %v762 = vunpack.c.h.b16 %v348
        %v763 = vunpack.c.l.b16 %v349
        %v764 = vunpack.c.h.b16 %v349
        %v765 = vunpack.c.l.b16 %v350
        %v766 = vunpack.c.h.b16 %v350
        %v767 = vunpack.c.l.b16 %v351
        %v768 = vunpack.c.h.b16 %v351
        %v769 = vunpack.c.l.b16 %v352
        %v770 = vunpack.c.h.b16 %v352
        %v771 = vunpack.c.l.b16 %v353
        %v772 = vunpack.c.h.b16 %v353
        %v773 = vunpack.c.l.b16 %v354
        %v774 = vunpack.c.h.b16 %v354
        %v775 = vunpack.c.l.b16 %v355
        %v776 = vunpack.c.h.b16 %v355
        %v777 = vunpack.c.l.b16 %v356
        %v778 = vunpack.c.h.b16 %v356
        %v779 = vunpack.c.l.b16 %v357
        %v780 = vunpack.c.h.b16 %v357
        %v781 = vunpack.c.l.b16 %v358
        %v782 = vunpack.c.h.b16 %v358
        %v783 = vunpack.c.l.b16 %v359
        %v784 = vunpack.c.h.b16 %v359
        %v785 = vunpack.c.l.b16 %v360
        %v786 = vunpack.c.h.b16 %v360
        %v787 = vunpack.c.l.b16 %v361
        %v788 = vunpack.c.h.b16 %v361
        %v789 = vunpack.c.l.b16 %v362
        %v790 = vunpack.c.h.b16 %v362
        %v791 = vunpack.c.l.b16 %v363
        %v792 = vunpack.c.h.b16 %v363
        %v793 = vunpack.c.l.b16 %v364
        %v794 = vunpack.c.h.b16 %v364
        %v795 = vunpack.c.l.b16 %v365
        %v796 = vunpack.c.h.b16 %v365
        %v797 = vunpack.c.l.b16 %v366
        %v798 = vunpack.c.h.b16 %v366
        %v799 = vunpack.c.l.b16 %v367
        %v800 = vunpack.c.h.b16 %v367
        %v801 = vunpack.c.l.b16 %v368
        %v802 = vunpack.c.h.b16 %v368
        %v803 = vunpack.c.l.b16 %v369
        %v804 = vunpack.c.h.b16 %v369
        %v805 = vunpack.c.l.b16 %v370
        %v806 = vunpack.c.h.b16 %v370
        %v807 = vunpack.c.l.b16 %v371
        %v808 = vunpack.c.h.b16 %v371
        %v809 = vunpack.c.l.b16 %v372
        %v810 = vunpack.c.h.b16 %v372
        %v811 = vunpack.c.l.b16 %v373
        %v812 = vunpack.c.h.b16 %v373
        %v813 = vunpack.c.l.b16 %v374
        %v814 = vunpack.c.h.b16 %v374
        %v815 = vunpack.c.l.b16 %v375
        %v816 = vunpack.c.h.b16 %v375
        %v817 = vunpack.c.l.b16 %v376
        %v818 = vunpack.c.h.b16 %v376
        %v819 = vunpack.c.l.b16 %v377
        %v820 = vunpack.c.h.b16 %v377
        %v821 = vunpack.c.l.b16 %v378
        %v822 = vunpack.c.h.b16 %v378
        %v823 = vunpack.c.l.b16 %v379
        %v824 = vunpack.c.h.b16 %v379
        %v825 = vunpack.c.l.b16 %v380
        %v826 = vunpack.c.h.b16 %v380
        %v827 = vunpack.c.l.b16 %v381
        %v828 = vunpack.c.h.b16 %v381
        %v829 = vunpack.c.l.b16 %v382
        %v830 = vunpack.c.h.b16 %v382
        %v831 = vunpack.c.l.b16 %v383
        %v832 = vunpack.c.h.b16 %v383
        %v833 = vunpack.c.l.b16 %v384
        %v834 = vunpack.c.h.b16 %v384
        %v835 = vunpack.c.l.b16 %v385
        %v836 = vunpack.c.h.b16 %v385
        %v837 = vunpack.c.l.b16 %v386
        %v838 = vunpack.c.h.b16 %v386
        %v839 = vunpack.c.l.b16 %v387
        %v840 = vunpack.c.h.b16 %v387
        %v841 = vunpack.c.l.b16 %v388
        %v842 = vunpack.c.h.b16 %v388
        %v843 = vunpack.c.l.b16 %v389
        %v844 = vunpack.c.h.b16 %v389
        %v845 = vunpack.c.l.b16 %v390
        %v846 = vunpack.c.h.b16 %v390
        %v847 = vunpack.c.l.b16 %v391
        %v848 = vunpack.c.h.b16 %v391
        %v849 = vunpack.c.l.b16 %v392
        %v850 = vunpack.c.h.b16 %v392
        %v851 = vunpack.c.l.b16 %v393
        %v852 = vunpack.c.h.b16 %v393
        %v853 = vunpack.c.l.b16 %v394
        %v854 = vunpack.c.h.b16 %v394
        %v855 = vunpack.c.l.b16 %v395
        %v856 = vunpack.c.h.b16 %v395
        %v857 = vunpack.c.l.b16 %v396
        %v858 = vunpack.c.h.b16 %v396
        %v859 = vunpack.c.l.b16 %v397
        %v860 = vunpack.c.h.b16 %v397
        %v861 = vunpack.c.l.b16 %v398
        %v862 = vunpack.c.h.b16 %v398
        %v863 = vunpack.c.l.b16 %v399
        %v864 = vunpack.c.h.b16 %v399
        %v865 = vunpack.c.l.b16 %v400
        %v866 = vunpack.c.h.b16 %v400
        %v867 = vunpack.c.l.b16 %v401
        %v868 = vunpack.c.h.b16 %v401
        %v869 = vunpack.c.l.b16 %v402
        %v870 = vunpack.c.h.b16 %v402
        %v871 = vunpack.c.l.b16 %v403
        %v872 = vunpack.c.h.b16 %v403
        %v873 = vunpack.c.l.b16 %v404
        %v874 = vunpack.c.h.b16 %v404
        %v875 = vunpack.c.l.b16 %v405
        %v876 = vunpack.c.h.b16 %v405
        %v877 = vunpack.c.l.b16 %v406
        %v878 = vunpack.c.h.b16 %v406
        %v879 = vunpack.c.l.b16 %v407
        %v880 = vunpack.c.h.b16 %v407
        %v881 = vunpack.c.l.b16 %v408
        %v882 = vunpack.c.h.b16 %v408
        %v883 = vunpack.c.l.b16 %v409
        %v884 = vunpack.c.h.b16 %v409
        %v885 = vunpack.c.l.b16 %v410
        %v886 = vunpack.c.h.b16 %v410
        %v887 = vunpack.c.l.b16 %v411
        %v888 = vunpack.c.h.b16 %v411
        %v889 = vunpack.c.l.b16 %v412
        %v890 = vunpack.c.h.b16 %v412
        %v891 = vunpack.c.l.b16 %v413
        %v892 = vunpack.c.h.b16 %v413
        %v893 = vunpack.c.l.b16 %v414
        %v894 = vunpack.c.h.b16 %v414
        %v895 = vunpack.c.l.b16 %v415
        %v896 = vunpack.c.h.b16 %v415
        %v897 = vunpack.c.l.b16 %v416
        %v898 = vunpack.c.h.b16 %v416
        %v899 = vunpack.c.l.b16 %v417
        %v900 = vunpack.c.h.b16 %v417
        %v901 = vunpack.c.l.b16 %v418
        %v902 = vunpack.c.h.b16 %v418
        %v903 = vunpack.c.l.b16 %v419
        %v904 = vunpack.c.h.b16 %v419
        %v905 = vunpack.c.l.b16 %v420
        %v906 = vunpack.c.h.b16 %v420
        %v907 = vunpack.c.l.b16 %v421
        %v908 = vunpack.c.h.b16 %v421
        %v909 = vunpack.c.l.b16 %v422
        %v910 = vunpack.c.h.b16 %v422
        %v911 = vunpack.c.l.b16 %v423
        %v912 = vunpack.c.h.b16 %v423
        %v913 = vunpack.c.l.b16 %v424
        %v914 = vunpack.c.h.b16 %v424
        %v915 = vunpack.c.l.b16 %v425
        %v916 = vunpack.c.h.b16 %v425
        %v917 = vunpack.c.l.b16 %v426
        %v918 = vunpack.c.h.b16 %v426
        %v919 = vunpack.c.l.b16 %v427
        %v920 = vunpack.c.h.b16 %v427
        %v921 = vunpack.c.l.b16 %v428
        %v922 = vunpack.c.h.b16 %v428
        %v923 = vunpack.c.l.b16 %v429
        %v924 = vunpack.c.h.b16 %v429
        %v925 = vunpack.c.l.b16 %v430
        %v926 = vunpack.c.h.b16 %v430
        %v927 = vunpack.c.l.b16 %v431
        %v928 = vunpack.c.h.b16 %v431
        %v929 = vunpack.c.l.b16 %v432
        %v930 = vunpack.c.h.b16 %v432
        %v931 = vunpack.c.l.b16 %v433
        %v932 = vunpack.c.h.b16 %v433
        %v933 = vunpack.c.l.b16 %v434
        %v934 = vunpack.c.h.b16 %v434
        %v935 = vunpack.c.l.b16 %v435
        %v936 = vunpack.c.h.b16 %v435
        %v937 = vunpack.c.l.b16 %v436
        %v938 = vunpack.c.h.b16 %v436
        %v939 = vunpack.c.l.b16 %v437
        %v940 = vunpack.c.h.b16 %v437
        %v941 = vunpack.c.l.b16 %v438
        %v942 = vunpack.c.h.b16 %v438
        %v943 = vunpack.c.l.b16 %v439
        %v944 = vunpack.c.h.b16 %v439
        %v945 = vunpack.c.l.b16 %v440
        %v946 = vunpack.c.h.b16 %v440
        %v947 = vunpack.c.l.b16 %v441
        %v948 = vunpack.c.h.b16 %v441
        %v949 = vunpack.c.l.b16 %v442
        %v950 = vunpack.c.h.b16 %v442
        %v951 = vunpack.c.l.b16 %v443
        %v952 = vunpack.c.h.b16 %v443
        %v953 = vunpack.c.l.b16 %v444
        %v954 = vunpack.c.h.b16 %v444
        %v955 = vunpack.c.l.b16 %v445
        %v956 = vunpack.c.h.b16 %v445
        %v957 = vunpack.c.l.b16 %v446
        %v958 = vunpack.c.h.b16 %v446
        %v959 = vpack.c.b16 %v711, %v703
        %v960 = vpack.c.b16 %v712, %v704
        %v961 = vpack.c.b16 %v713, %v705
        %v962 = vpack.c.b16 %v714, %v706
        %v963 = vpack.c.b16 %v715, %v707
        %v964 = vpack.c.b16 %v716, %v708
        %v965 = vpack.c.b16 %v717, %v709
        %v966 = vpack.c.b16 %v718, %v710
        %v967 = vpack.c.b16 %v727, %v719
        %v968 = vpack.c.b16 %v728, %v720
        %v969 = vpack.c.b16 %v729, %v721
        %v970 = vpack.c.b16 %v730, %v722
        %v971 = vpack.c.b16 %v731, %v723
        %v972 = vpack.c.b16 %v732, %v724
        %v973 = vpack.c.b16 %v733, %v725
        %v974 = vpack.c.b16 %v734, %v726
        %v975 = vpack.c.b16 %v743, %v735
        %v976 = vpack.c.b16 %v744, %v736
        %v977 = vpack.c.b16 %v745, %v737
        %v978 = vpack.c.b16 %v746, %v738
        %v979 = vpack.c.b16 %v747, %v739
        %v980 = vpack.c.b16 %v748, %v740
        %v981 = vpack.c.b16 %v749, %v741
        %v982 = vpack.c.b16 %v750, %v742
        %v983 = vpack.c.b16 %v759, %v751
        %v984 = vpack.c.b16 %v760, %v752
        %v985 = vpack.c.b16 %v761, %v753
        %v986 = vpack.c.b16 %v762, %v754
        %v987 = vpack.c.b16 %v763, %v755
        %v988 = vpack.c.b16 %v764, %v756
        %v989 = vpack.c.b16 %v765, %v757
        %v990 = vpack.c.b16 %v766, %v758
        %v991 = vpack.c.b16 %v775, %v767
        %v992 = vpack.c.b16 %v776, %v768
        %v993 = vpack.c.b16 %v777, %v769
        %v994 = vpack.c.b16 %v778, %v770
        %v995 = vpack.c.b16 %v779, %v771
        %v996 = vpack.c.b16 %v780, %v772
        %v997 = vpack.c.b16 %v781, %v773
        %v998 = vpack.c.b16 %v782, %v774
        %v999 = vpack.c.b16 %v791, %v783
        %v1000 = vpack.c.b16 %v792, %v784
        %v1001 = vpack.c.b16 %v793, %v785
        %v1002 = vpack.c.b16 %v794, %v786
        %v1003 = vpack.c.b16 %v795, %v787
        %v1004 = vpack.c.b16 %v796, %v788
        %v1005 = vpack.c.b16 %v797, %v789
        %v1006 = vpack.c.b16 %v798, %v790
        %v1007 = vpack.c.b16 %v807, %v799
        %v1008 = vpack.c.b16 %v808, %v800
        %v1009 = vpack.c.b16 %v809, %v801
        %v1010 = vpack.c.b16 %v810, %v802
        %v1011 = vpack.c.b16 %v811, %v803
        %v1012 = vpack.c.b16 %v812, %v804
        %v1013 = vpack.c.b16 %v813, %v805
        %v1014 = vpack.c.b16 %v814, %v806
        %v1015 = vpack.c.b16 %v823, %v815
        %v1016 = vpack.c.b16 %v824, %v816
        %v1017 = vpack.c.b16 %v825, %v817
        %v1018 = vpack.c.b16 %v826, %v818
        %v1019 = vpack.c.b16 %v827, %v819
        %v1020 = vpack.c.b16 %v828, %v820
        %v1021 = vpack.c.b16 %v829, %v821
        %v1022 = vpack.c.b16 %v830, %v822
        %v1023 = vpack.c.b16 %v839, %v831
        %v1024 = vpack.c.b16 %v840, %v832
        %v1025 = vpack.c.b16 %v841, %v833
        %v1026 = vpack.c.b16 %v842, %v834
        %v1027 = vpack.c.b16 %v843, %v835
        %v1028 = vpack.c.b16 %v844, %v836
        %v1029 = vpack.c.b16 %v845, %v837
        %v1030 = vpack.c.b16 %v846, %v838
        %v1031 = vpack.c.b16 %v855, %v847
        %v1032 = vpack.c.b16 %v856, %v848
        %v1033 = vpack.c.b16 %v857, %v849
        %v1034 = vpack.c.b16 %v858, %v850
        %v1035 = vpack.c.b16 %v859, %v851
        %v1036 = vpack.c.b16 %v860, %v852
        %v1037 = vpack.c.b16 %v861, %v853
        %v1038 = vpack.c.b16 %v862, %v854
        %v1039 = vpack.c.b16 %v871, %v863
        %v1040 = vpack.c.b16 %v872, %v864
        %v1041 = vpack.c.b16 %v873, %v865
        %v1042 = vpack.c.b16 %v874, %v866
        %v1043 = vpack.c.b16 %v875, %v867
        %v1044 = vpack.c.b16 %v876, %v868
        %v1045 = vpack.c.b16 %v877, %v869
        %v1046 = vpack.c.b16 %v878, %v870
        %v1047 = vpack.c.b16 %v887, %v879
        %v1048 = vpack.c.b16 %v888, %v880
        %v1049 = vpack.c.b16 %v889, %v881
        %v1050 = vpack.c.b16 %v890, %v882
        %v1051 = vpack.c.b16 %v891, %v883
        %v1052 = vpack.c.b16 %v892, %v884
        %v1053 = vpack.c.b16 %v893, %v885
        %v1054 = vpack.c.b16 %v894, %v886
        %v1055 = vpack.c.b16 %v903, %v895
        %v1056 = vpack.c.b16 %v904, %v896
        %v1057 = vpack.c.b16 %v905, %v897
        %v1058 = vpack.c.b16 %v906, %v898
        %v1059 = vpack.c.b16 %v907, %v899
        %v1060 = vpack.c.b16 %v908, %v900
        %v1061 = vpack.c.b16 %v909, %v901
        %v1062 = vpack.c.b16 %v910, %v902
        %v1063 = vpack.c.b16 %v919, %v911
        %v1064 = vpack.c.b16 %v920, %v912
        %v1065 = vpack.c.b16 %v921, %v913
        %v1066 = vpack.c.b16 %v922, %v914
        %v1067 = vpack.c.b16 %v923, %v915
        %v1068 = vpack.c.b16 %v924, %v916
        %v1069 = vpack.c.b16 %v925, %v917
        %v1070 = vpack.c.b16 %v926, %v918
        %v1071 = vpack.c.b16 %v935, %v927
        %v1072 = vpack.c.b16 %v936, %v928
        %v1073 = vpack.c.b16 %v937, %v929
        %v1074 = vpack.c.b16 %v938, %v930
        %v1075 = vpack.c.b16 %v939, %v931
        %v1076 = vpack.c.b16 %v940, %v932
        %v1077 = vpack.c.b16 %v941, %v933
        %v1078 = vpack.c.b16 %v942, %v934
        %v1079 = vpack.c.b16 %v951, %v943
        %v1080 = vpack.c.b16 %v952, %v944
        %v1081 = vpack.c.b16 %v953, %v945
        %v1082 = vpack.c.b16 %v954, %v946
        %v1083 = vpack.c.b16 %v955, %v947
        %v1084 = vpack.c.b16 %v956, %v948
        %v1085 = vpack.c.b16 %v957, %v949
        %v1086 = vpack.c.b16 %v958, %v950
        %v1343 = vunpack.c.l.b16 %v447
        %v1344 = vunpack.c.l.b16 %v448
        %v1345 = vunpack.c.l.b16 %v449
        %v1346 = vunpack.c.l.b16 %v450
        %v1347 = vunpack.c.l.b16 %v451
        %v1348 = vunpack.c.l.b16 %v452
        %v1349 = vunpack.c.l.b16 %v453
        %v1350 = vunpack.c.l.b16 %v454
        %v1351 = vunpack.c.l.b16 %v455
        %v1352 = vunpack.c.l.b16 %v456
        %v1353 = vunpack.c.l.b16 %v457
        %v1354 = vunpack.c.l.b16 %v458
        %v1355 = vunpack.c.l.b16 %v459
        %v1356 = vunpack.c.l.b16 %v460
        %v1357 = vunpack.c.l.b16 %v461
        %v1358 = vunpack.c.l.b16 %v462
        %v1359 = vunpack.c.l.b16 %v463
        %v1360 = vunpack.c.l.b16 %v464
        %v1361 = vunpack.c.l.b16 %v465
        %v1362 = vunpack.c.l.b16 %v466
        %v1363 = vunpack.c.l.b16 %v467
        %v1364 = vunpack.c.l.b16 %v468
        %v1365 = vunpack.c.l.b16 %v469
        %v1366 = vunpack.c.l.b16 %v470
        %v1367 = vunpack.c.l.b16 %v471
        %v1368 = vunpack.c.l.b16 %v472
        %v1369 = vunpack.c.l.b16 %v473
        %v1370 = vunpack.c.l.b16 %v474
        %v1371 = vunpack.c.l.b16 %v475
        %v1372 = vunpack.c.l.b16 %v476
        %v1373 = vunpack.c.l.b16 %v477
        %v1374 = vunpack.c.l.b16 %v478
        %v1375 = vunpack.c.l.b16 %v479
        %v1376 = vunpack.c.l.b16 %v480
        %v1377 = vunpack.c.l.b16 %v481
        %v1378 = vunpack.c.l.b16 %v482
        %v1379 = vunpack.c.l.b16 %v483
        %v1380 = vunpack.c.l.b16 %v484
        %v1381 = vunpack.c.l.b16 %v485
        %v1382 = vunpack.c.l.b16 %v486
        %v1383 = vunpack.c.l.b16 %v487
        %v1384 = vunpack.c.l.b16 %v488
        %v1385 = vunpack.c.l.b16 %v489
        %v1386 = vunpack.c.l.b16 %v490
        %v1387 = vunpack.c.l.b16 %v491
        %v1388 = vunpack.c.l.b16 %v492
        %v1389 = vunpack.c.l.b16 %v493
        %v1390 = vunpack.c.l.b16 %v494
        %v1391 = vunpack.c.l.b16 %v495
        %v1392 = vunpack.c.l.b16 %v496
        %v1393 = vunpack.c.l.b16 %v497
        %v1394 = vunpack.c.l.b16 %v498
        %v1395 = vunpack.c.l.b16 %v499
        %v1396 = vunpack.c.l.b16 %v500
        %v1397 = vunpack.c.l.b16 %v501
        %v1398 = vunpack.c.l.b16 %v502
        %v1399 = vunpack.c.l.b16 %v503
        %v1400 = vunpack.c.l.b16 %v504
        %v1401 = vunpack.c.l.b16 %v505
        %v1402 = vunpack.c.l.b16 %v506
        %v1403 = vunpack.c.l.b16 %v507
        %v1404 = vunpack.c.l.b16 %v508
        %v1405 = vunpack.c.l.b16 %v509
        %v1406 = vunpack.c.l.b16 %v510
        %v1407 = vunpack.c.l.b16 %v511
        %v1408 = vunpack.c.l.b16 %v512
        %v1409 = vunpack.c.l.b16 %v513
        %v1410 = vunpack.c.l.b16 %v514
        %v1411 = vunpack.c.l.b16 %v515
        %v1412 = vunpack.c.l.b16 %v516
        %v1413 = vunpack.c.l.b16 %v517
        %v1414 = vunpack.c.l.b16 %v518
        %v1415 = vunpack.c.l.b16 %v519
        %v1416 = vunpack.c.l.b16 %v520
        %v1417 = vunpack.c.l.b16 %v521
        %v1418 = vunpack.c.l.b16 %v522
        %v1419 = vunpack.c.l.b16 %v523
        %v1420 = vunpack.c.l.b16 %v524
        %v1421 = vunpack.c.l.b16 %v525
        %v1422 = vunpack.c.l.b16 %v526
        %v1423 = vunpack.c.l.b16 %v527
        %v1424 = vunpack.c.l.b16 %v528
        %v1425 = vunpack.c.l.b16 %v529
        %v1426 = vunpack.c.l.b16 %v530
        %v1427 = vunpack.c.l.b16 %v531
        %v1428 = vunpack.c.l.b16 %v532
        %v1429 = vunpack.c.l.b16 %v533
        %v1430 = vunpack.c.l.b16 %v534
        %v1431 = vunpack.c.l.b16 %v535
        %v1432 = vunpack.c.l.b16 %v536
        %v1433 = vunpack.c.l.b16 %v537
        %v1434 = vunpack.c.l.b16 %v538
        %v1435 = vunpack.c.l.b16 %v539
        %v1436 = vunpack.c.l.b16 %v540
        %v1437 = vunpack.c.l.b16 %v541
        %v1438 = vunpack.c.l.b16 %v542
        %v1439 = vunpack.c.l.b16 %v543
        %v1440 = vunpack.c.l.b16 %v544
        %v1441 = vunpack.c.l.b16 %v545
        %v1442 = vunpack.c.l.b16 %v546
        %v1443 = vunpack.c.l.b16 %v547
        %v1444 = vunpack.c.l.b16 %v548
        %v1445 = vunpack.c.l.b16 %v549
        %v1446 = vunpack.c.l.b16 %v550
        %v1447 = vunpack.c.l.b16 %v551
        %v1448 = vunpack.c.l.b16 %v552
        %v1449 = vunpack.c.l.b16 %v553
        %v1450 = vunpack.c.l.b16 %v554
        %v1451 = vunpack.c.l.b16 %v555
        %v1452 = vunpack.c.l.b16 %v556
        %v1453 = vunpack.c.l.b16 %v557
        %v1454 = vunpack.c.l.b16 %v558
        %v1455 = vunpack.c.l.b16 %v559
        %v1456 = vunpack.c.l.b16 %v560
        %v1457 = vunpack.c.l.b16 %v561
        %v1458 = vunpack.c.l.b16 %v562
        %v1459 = vunpack.c.l.b16 %v563
        %v1460 = vunpack.c.l.b16 %v564
        %v1461 = vunpack.c.l.b16 %v565
        %v1462 = vunpack.c.l.b16 %v566
        %v1463 = vunpack.c.l.b16 %v567
        %v1464 = vunpack.c.l.b16 %v568
        %v1465 = vunpack.c.l.b16 %v569
        %v1466 = vunpack.c.l.b16 %v570
        %v1467 = vunpack.c.l.b16 %v571
        %v1468 = vunpack.c.l.b16 %v572
        %v1469 = vunpack.c.l.b16 %v573
        %v1470 = vunpack.c.l.b16 %v574
        %v1471 = vpack.c.b16 %v1344, %v1343
        %v1472 = vpack.c.b16 %v1346, %v1345
        %v1473 = vpack.c.b16 %v1348, %v1347
        %v1474 = vpack.c.b16 %v1350, %v1349
        %v1475 = vpack.c.b16 %v1352, %v1351
        %v1476 = vpack.c.b16 %v1354, %v1353
        %v1477 = vpack.c.b16 %v1356, %v1355
        %v1478 = vpack.c.b16 %v1358, %v1357
        %v1479 = vpack.c.b16 %v1360, %v1359
        %v1480 = vpack.c.b16 %v1362, %v1361
        %v1481 = vpack.c.b16 %v1364, %v1363
        %v1482 = vpack.c.b16 %v1366, %v1365
        %v1483 = vpack.c.b16 %v1368, %v1367
        %v1484 = vpack.c.b16 %v1370, %v1369
        %v1485 = vpack.c.b16 %v1372, %v1371
        %v1486 = vpack.c.b16 %v1374, %v1373
        %v1487 = vpack.c.b16 %v1376, %v1375
        %v1488 = vpack.c.b16 %v1378, %v1377
        %v1489 = vpack.c.b16 %v1380, %v1379
        %v1490 = vpack.c.b16 %v1382, %v1381
        %v1491 = vpack.c.b16 %v1384, %v1383
        %v1492 = vpack.c.b16 %v1386, %v1385
        %v1493 = vpack.c.b16 %v1388, %v1387
        %v1494 = vpack.c.b16 %v1390, %v1389
        %v1495 = vpack.c.b16 %v1392, %v1391
        %v1496 = vpack.c.b16 %v1394, %v1393
        %v1497 = vpack.c.b16 %v1396, %v1395
        %v1498 = vpack.c.b16 %v1398, %v1397
        %v1499 = vpack.c.b16 %v1400, %v1399
        %v1500 = vpack.c.b16 %v1402, %v1401
        %v1501 = vpack.c.b16 %v1404, %v1403
        %v1502 = vpack.c.b16 %v1406, %v1405
        %v1503 = vpack.c.b16 %v1408, %v1407
        %v1504 = vpack.c.b16 %v1410, %v1409
        %v1505 = vpack.c.b16 %v1412, %v1411
        %v1506 = vpack.c.b16 %v1414, %v1413
        %v1507 = vpack.c.b16 %v1416, %v1415
        %v1508 = vpack.c.b16 %v1418, %v1417
        %v1509 = vpack.c.b16 %v1420, %v1419
        %v1510 = vpack.c.b16 %v1422, %v1421
        %v1511 = vpack.c.b16 %v1424, %v1423
        %v1512 = vpack.c.b16 %v1426, %v1425
        %v1513 = vpack.c.b16 %v1428, %v1427
        %v1514 = vpack.c.b16 %v1430, %v1429
        %v1515 = vpack.c.b16 %v1432, %v1431
        %v1516 = vpack.c.b16 %v1434, %v1433
        %v1517 = vpack.c.b16 %v1436, %v1435
        %v1518 = vpack.c.b16 %v1438, %v1437
        %v1519 = vpack.c.b16 %v1440, %v1439
        %v1520 = vpack.c.b16 %v1442, %v1441
        %v1521 = vpack.c.b16 %v1444, %v1443
        %v1522 = vpack.c.b16 %v1446, %v1445
        %v1523 = vpack.c.b16 %v1448, %v1447
        %v1524 = vpack.c.b16 %v1450, %v1449
        %v1525 = vpack.c.b16 %v1452, %v1451
        %v1526 = vpack.c.b16 %v1454, %v1453
        %v1527 = vpack.c.b16 %v1456, %v1455
        %v1528 = vpack.c.b16 %v1458, %v1457
        %v1529 = vpack.c.b16 %v1460, %v1459
        %v1530 = vpack.c.b16 %v1462, %v1461
        %v1531 = vpack.c.b16 %v1464, %v1463
        %v1532 = vpack.c.b16 %v1466, %v1465
        %v1533 = vpack.c.b16 %v1468, %v1467
        %v1534 = vpack.c.b16 %v1470, %v1469
        %1599 = vmatpush.bf16.msra.mxu0 %v1478
        %1600 = vmatpush.bf16.msra.mxu0 %v1477
        %1601 = vmatpush.bf16.msra.mxu0 %v1476
        %1602 = vmatpush.bf16.msra.mxu0 %v1475
        %1603 = vmatpush.bf16.msra.mxu0 %v1474
        %1604 = vmatpush.bf16.msra.mxu0 %v1473
        %1605 = vmatpush.bf16.msra.mxu0 %v1472
        %1606 = vmatpush.bf16.msra.mxu0 %v1471
        %1607 = vmatmul.bf16.gmra.mxu0 %v959
        %v1608 = vpop.f32.mrf.mxu0
        %v1609 = vadd.f32 0.0, %v1608
        %v1610 = vpop.f32.mrf.mxu0
        %v1611 = vadd.f32 0.0, %v1610
        %1612 = vmatmul.bf16.gmra.mxu0 %v967
        %v1613 = vpop.f32.mrf.mxu0
        %v1614 = vadd.f32 0.0, %v1613
        %v1615 = vpop.f32.mrf.mxu0
        %v1616 = vadd.f32 0.0, %v1615
        %1617 = vmatmul.bf16.gmra.mxu0 %v975
        %v1618 = vpop.f32.mrf.mxu0
        %v1619 = vadd.f32 0.0, %v1618
        %v1620 = vpop.f32.mrf.mxu0
        %v1621 = vadd.f32 0.0, %v1620
        %1622 = vmatmul.bf16.gmra.mxu0 %v983
        %v1623 = vpop.f32.mrf.mxu0
        %v1624 = vadd.f32 0.0, %v1623
        %v1625 = vpop.f32.mrf.mxu0
        %v1626 = vadd.f32 0.0, %v1625
        %1627 = vmatmul.bf16.gmra.mxu0 %v991
        %v1628 = vpop.f32.mrf.mxu0
        %v1629 = vadd.f32 0.0, %v1628
        %v1630 = vpop.f32.mrf.mxu0
        %v1631 = vadd.f32 0.0, %v1630
        %1632 = vmatmul.bf16.gmra.mxu0 %v999
        %v1633 = vpop.f32.mrf.mxu0
        %v1634 = vadd.f32 0.0, %v1633
        %v1635 = vpop.f32.mrf.mxu0
        %v1636 = vadd.f32 0.0, %v1635
        %1637 = vmatmul.bf16.gmra.mxu0 %v1007
        %v1638 = vpop.f32.mrf.mxu0
        %v1639 = vadd.f32 0.0, %v1638
        %v1640 = vpop.f32.mrf.mxu0
        %v1641 = vadd.f32 0.0, %v1640
        %1642 = vmatmul.bf16.gmra.mxu0 %v1015
        %v1643 = vpop.f32.mrf.mxu0
        %v1644 = vadd.f32 0.0, %v1643
        %v1645 = vpop.f32.mrf.mxu0
        %v1646 = vadd.f32 0.0, %v1645
        %1647 = vmatmul.bf16.gmra.mxu0 %v1023
        %v1648 = vpop.f32.mrf.mxu0
        %v1649 = vadd.f32 0.0, %v1648
        %v1650 = vpop.f32.mrf.mxu0
        %v1651 = vadd.f32 0.0, %v1650
        %1652 = vmatmul.bf16.gmra.mxu0 %v1031
        %v1653 = vpop.f32.mrf.mxu0
        %v1654 = vadd.f32 0.0, %v1653
        %v1655 = vpop.f32.mrf.mxu0
        %v1656 = vadd.f32 0.0, %v1655
        %1657 = vmatmul.bf16.gmra.mxu0 %v1039
        %v1658 = vpop.f32.mrf.mxu0
        %v1659 = vadd.f32 0.0, %v1658
        %v1660 = vpop.f32.mrf.mxu0
        %v1661 = vadd.f32 0.0, %v1660
        %1662 = vmatmul.bf16.gmra.mxu0 %v1047
        %v1663 = vpop.f32.mrf.mxu0
        %v1664 = vadd.f32 0.0, %v1663
        %v1665 = vpop.f32.mrf.mxu0
        %v1666 = vadd.f32 0.0, %v1665
        %1667 = vmatmul.bf16.gmra.mxu0 %v1055
        %v1668 = vpop.f32.mrf.mxu0
        %v1669 = vadd.f32 0.0, %v1668
        %v1670 = vpop.f32.mrf.mxu0
        %v1671 = vadd.f32 0.0, %v1670
        %1672 = vmatmul.bf16.gmra.mxu0 %v1063
        %v1673 = vpop.f32.mrf.mxu0
        %v1674 = vadd.f32 0.0, %v1673
        %v1675 = vpop.f32.mrf.mxu0
        %v1676 = vadd.f32 0.0, %v1675
        %1677 = vmatmul.bf16.gmra.mxu0 %v1071
        %v1678 = vpop.f32.mrf.mxu0
        %v1679 = vadd.f32 0.0, %v1678
        %v1680 = vpop.f32.mrf.mxu0
        %v1681 = vadd.f32 0.0, %v1680
        %1682 = vmatmul.bf16.gmra.mxu0 %v1079
        %v1683 = vpop.f32.mrf.mxu0
        %v1684 = vadd.f32 0.0, %v1683
        %v1685 = vpop.f32.mrf.mxu0
        %v1686 = vadd.f32 0.0, %v1685
        %1687 = vdwg.mxu0
        %1688 = vmatpush.bf16.msra.mxu0 %v1486
        %1689 = vmatpush.bf16.msra.mxu0 %v1485
        %1690 = vmatpush.bf16.msra.mxu0 %v1484
        %1691 = vmatpush.bf16.msra.mxu0 %v1483
        %1692 = vmatpush.bf16.msra.mxu0 %v1482
        %1693 = vmatpush.bf16.msra.mxu0 %v1481
        %1694 = vmatpush.bf16.msra.mxu0 %v1480
        %1695 = vmatpush.bf16.msra.mxu0 %v1479
        %1696 = vmatmul.bf16.gmra.mxu0 %v960
        %v1697 = vpop.f32.mrf.mxu0
        %v1698 = vadd.f32 %v1609, %v1697
        %v1699 = vpop.f32.mrf.mxu0
        %v1700 = vadd.f32 %v1611, %v1699
        %1701 = vmatmul.bf16.gmra.mxu0 %v968
        %v1702 = vpop.f32.mrf.mxu0
        %v1703 = vadd.f32 %v1614, %v1702
        %v1704 = vpop.f32.mrf.mxu0
        %v1705 = vadd.f32 %v1616, %v1704
        %1706 = vmatmul.bf16.gmra.mxu0 %v976
        %v1707 = vpop.f32.mrf.mxu0
        %v1708 = vadd.f32 %v1619, %v1707
        %v1709 = vpop.f32.mrf.mxu0
        %v1710 = vadd.f32 %v1621, %v1709
        %1711 = vmatmul.bf16.gmra.mxu0 %v984
        %v1712 = vpop.f32.mrf.mxu0
        %v1713 = vadd.f32 %v1624, %v1712
        %v1714 = vpop.f32.mrf.mxu0
        %v1715 = vadd.f32 %v1626, %v1714
        %1716 = vmatmul.bf16.gmra.mxu0 %v992
        %v1717 = vpop.f32.mrf.mxu0
        %v1718 = vadd.f32 %v1629, %v1717
        %v1719 = vpop.f32.mrf.mxu0
        %v1720 = vadd.f32 %v1631, %v1719
        %1721 = vmatmul.bf16.gmra.mxu0 %v1000
        %v1722 = vpop.f32.mrf.mxu0
        %v1723 = vadd.f32 %v1634, %v1722
        %v1724 = vpop.f32.mrf.mxu0
        %v1725 = vadd.f32 %v1636, %v1724
        %1726 = vmatmul.bf16.gmra.mxu0 %v1008
        %v1727 = vpop.f32.mrf.mxu0
        %v1728 = vadd.f32 %v1639, %v1727
        %v1729 = vpop.f32.mrf.mxu0
        %v1730 = vadd.f32 %v1641, %v1729
        %1731 = vmatmul.bf16.gmra.mxu0 %v1016
        %v1732 = vpop.f32.mrf.mxu0
        %v1733 = vadd.f32 %v1644, %v1732
        %v1734 = vpop.f32.mrf.mxu0
        %v1735 = vadd.f32 %v1646, %v1734
        %1736 = vmatmul.bf16.gmra.mxu0 %v1024
        %v1737 = vpop.f32.mrf.mxu0
        %v1738 = vadd.f32 %v1649, %v1737
        %v1739 = vpop.f32.mrf.mxu0
        %v1740 = vadd.f32 %v1651, %v1739
        %1741 = vmatmul.bf16.gmra.mxu0 %v1032
        %v1742 = vpop.f32.mrf.mxu0
        %v1743 = vadd.f32 %v1654, %v1742
        %v1744 = vpop.f32.mrf.mxu0
        %v1745 = vadd.f32 %v1656, %v1744
        %1746 = vmatmul.bf16.gmra.mxu0 %v1040
        %v1747 = vpop.f32.mrf.mxu0
        %v1748 = vadd.f32 %v1659, %v1747
        %v1749 = vpop.f32.mrf.mxu0
        %v1750 = vadd.f32 %v1661, %v1749
        %1751 = vmatmul.bf16.gmra.mxu0 %v1048
        %v1752 = vpop.f32.mrf.mxu0
        %v1753 = vadd.f32 %v1664, %v1752
        %v1754 = vpop.f32.mrf.mxu0
        %v1755 = vadd.f32 %v1666, %v1754
        %1756 = vmatmul.bf16.gmra.mxu0 %v1056
        %v1757 = vpop.f32.mrf.mxu0
        %v1758 = vadd.f32 %v1669, %v1757
        %v1759 = vpop.f32.mrf.mxu0
        %v1760 = vadd.f32 %v1671, %v1759
        %1761 = vmatmul.bf16.gmra.mxu0 %v1064
        %v1762 = vpop.f32.mrf.mxu0
        %v1763 = vadd.f32 %v1674, %v1762
        %v1764 = vpop.f32.mrf.mxu0
        %v1765 = vadd.f32 %v1676, %v1764
        %1766 = vmatmul.bf16.gmra.mxu0 %v1072
        %v1767 = vpop.f32.mrf.mxu0
        %v1768 = vadd.f32 %v1679, %v1767
        %v1769 = vpop.f32.mrf.mxu0
        %v1770 = vadd.f32 %v1681, %v1769
        %1771 = vmatmul.bf16.gmra.mxu0 %v1080
        %v1772 = vpop.f32.mrf.mxu0
        %v1773 = vadd.f32 %v1684, %v1772
        %v1774 = vpop.f32.mrf.mxu0
        %v1775 = vadd.f32 %v1686, %v1774
        %1776 = vdwg.mxu0
        %1777 = vmatpush.bf16.msra.mxu0 %v1494
        %1778 = vmatpush.bf16.msra.mxu0 %v1493
        %1779 = vmatpush.bf16.msra.mxu0 %v1492
        %1780 = vmatpush.bf16.msra.mxu0 %v1491
        %1781 = vmatpush.bf16.msra.mxu0 %v1490
        %1782 = vmatpush.bf16.msra.mxu0 %v1489
        %1783 = vmatpush.bf16.msra.mxu0 %v1488
        %1784 = vmatpush.bf16.msra.mxu0 %v1487
        %1785 = vmatmul.bf16.gmra.mxu0 %v961
        %v1786 = vpop.f32.mrf.mxu0
        %v1787 = vadd.f32 %v1698, %v1786
        %v1788 = vpop.f32.mrf.mxu0
        %v1789 = vadd.f32 %v1700, %v1788
        %1790 = vmatmul.bf16.gmra.mxu0 %v969
        %v1791 = vpop.f32.mrf.mxu0
        %v1792 = vadd.f32 %v1703, %v1791
        %v1793 = vpop.f32.mrf.mxu0
        %v1794 = vadd.f32 %v1705, %v1793
        %1795 = vmatmul.bf16.gmra.mxu0 %v977
        %v1796 = vpop.f32.mrf.mxu0
        %v1797 = vadd.f32 %v1708, %v1796
        %v1798 = vpop.f32.mrf.mxu0
        %v1799 = vadd.f32 %v1710, %v1798
        %1800 = vmatmul.bf16.gmra.mxu0 %v985
        %v1801 = vpop.f32.mrf.mxu0
        %v1802 = vadd.f32 %v1713, %v1801
        %v1803 = vpop.f32.mrf.mxu0
        %v1804 = vadd.f32 %v1715, %v1803
        %1805 = vmatmul.bf16.gmra.mxu0 %v993
        %v1806 = vpop.f32.mrf.mxu0
        %v1807 = vadd.f32 %v1718, %v1806
        %v1808 = vpop.f32.mrf.mxu0
        %v1809 = vadd.f32 %v1720, %v1808
        %1810 = vmatmul.bf16.gmra.mxu0 %v1001
        %v1811 = vpop.f32.mrf.mxu0
        %v1812 = vadd.f32 %v1723, %v1811
        %v1813 = vpop.f32.mrf.mxu0
        %v1814 = vadd.f32 %v1725, %v1813
        %1815 = vmatmul.bf16.gmra.mxu0 %v1009
        %v1816 = vpop.f32.mrf.mxu0
        %v1817 = vadd.f32 %v1728, %v1816
        %v1818 = vpop.f32.mrf.mxu0
        %v1819 = vadd.f32 %v1730, %v1818
        %1820 = vmatmul.bf16.gmra.mxu0 %v1017
        %v1821 = vpop.f32.mrf.mxu0
        %v1822 = vadd.f32 %v1733, %v1821
        %v1823 = vpop.f32.mrf.mxu0
        %v1824 = vadd.f32 %v1735, %v1823
        %1825 = vmatmul.bf16.gmra.mxu0 %v1025
        %v1826 = vpop.f32.mrf.mxu0
        %v1827 = vadd.f32 %v1738, %v1826
        %v1828 = vpop.f32.mrf.mxu0
        %v1829 = vadd.f32 %v1740, %v1828
        %1830 = vmatmul.bf16.gmra.mxu0 %v1033
        %v1831 = vpop.f32.mrf.mxu0
        %v1832 = vadd.f32 %v1743, %v1831
        %v1833 = vpop.f32.mrf.mxu0
        %v1834 = vadd.f32 %v1745, %v1833
        %1835 = vmatmul.bf16.gmra.mxu0 %v1041
        %v1836 = vpop.f32.mrf.mxu0
        %v1837 = vadd.f32 %v1748, %v1836
        %v1838 = vpop.f32.mrf.mxu0
        %v1839 = vadd.f32 %v1750, %v1838
        %1840 = vmatmul.bf16.gmra.mxu0 %v1049
        %v1841 = vpop.f32.mrf.mxu0
        %v1842 = vadd.f32 %v1753, %v1841
        %v1843 = vpop.f32.mrf.mxu0
        %v1844 = vadd.f32 %v1755, %v1843
        %1845 = vmatmul.bf16.gmra.mxu0 %v1057
        %v1846 = vpop.f32.mrf.mxu0
        %v1847 = vadd.f32 %v1758, %v1846
        %v1848 = vpop.f32.mrf.mxu0
        %v1849 = vadd.f32 %v1760, %v1848
        %1850 = vmatmul.bf16.gmra.mxu0 %v1065
        %v1851 = vpop.f32.mrf.mxu0
        %v1852 = vadd.f32 %v1763, %v1851
        %v1853 = vpop.f32.mrf.mxu0
        %v1854 = vadd.f32 %v1765, %v1853
        %1855 = vmatmul.bf16.gmra.mxu0 %v1073
        %v1856 = vpop.f32.mrf.mxu0
        %v1857 = vadd.f32 %v1768, %v1856
        %v1858 = vpop.f32.mrf.mxu0
        %v1859 = vadd.f32 %v1770, %v1858
        %1860 = vmatmul.bf16.gmra.mxu0 %v1081
        %v1861 = vpop.f32.mrf.mxu0
        %v1862 = vadd.f32 %v1773, %v1861
        %v1863 = vpop.f32.mrf.mxu0
        %v1864 = vadd.f32 %v1775, %v1863
        %1865 = vdwg.mxu0
        %1866 = vmatpush.bf16.msra.mxu0 %v1502
        %1867 = vmatpush.bf16.msra.mxu0 %v1501
        %1868 = vmatpush.bf16.msra.mxu0 %v1500
        %1869 = vmatpush.bf16.msra.mxu0 %v1499
        %1870 = vmatpush.bf16.msra.mxu0 %v1498
        %1871 = vmatpush.bf16.msra.mxu0 %v1497
        %1872 = vmatpush.bf16.msra.mxu0 %v1496
        %1873 = vmatpush.bf16.msra.mxu0 %v1495
        %1874 = vmatmul.bf16.gmra.mxu0 %v962
        %v1875 = vpop.f32.mrf.mxu0
        %v1876 = vadd.f32 %v1787, %v1875
        %v1877 = vpop.f32.mrf.mxu0
        %v1878 = vadd.f32 %v1789, %v1877
        %1879 = vmatmul.bf16.gmra.mxu0 %v970
        %v1880 = vpop.f32.mrf.mxu0
        %v1881 = vadd.f32 %v1792, %v1880
        %v1882 = vpop.f32.mrf.mxu0
        %v1883 = vadd.f32 %v1794, %v1882
        %1884 = vmatmul.bf16.gmra.mxu0 %v978
        %v1885 = vpop.f32.mrf.mxu0
        %v1886 = vadd.f32 %v1797, %v1885
        %v1887 = vpop.f32.mrf.mxu0
        %v1888 = vadd.f32 %v1799, %v1887
        %1889 = vmatmul.bf16.gmra.mxu0 %v986
        %v1890 = vpop.f32.mrf.mxu0
        %v1891 = vadd.f32 %v1802, %v1890
        %v1892 = vpop.f32.mrf.mxu0
        %v1893 = vadd.f32 %v1804, %v1892
        %1894 = vmatmul.bf16.gmra.mxu0 %v994
        %v1895 = vpop.f32.mrf.mxu0
        %v1896 = vadd.f32 %v1807, %v1895
        %v1897 = vpop.f32.mrf.mxu0
        %v1898 = vadd.f32 %v1809, %v1897
        %1899 = vmatmul.bf16.gmra.mxu0 %v1002
        %v1900 = vpop.f32.mrf.mxu0
        %v1901 = vadd.f32 %v1812, %v1900
        %v1902 = vpop.f32.mrf.mxu0
        %v1903 = vadd.f32 %v1814, %v1902
        %1904 = vmatmul.bf16.gmra.mxu0 %v1010
        %v1905 = vpop.f32.mrf.mxu0
        %v1906 = vadd.f32 %v1817, %v1905
        %v1907 = vpop.f32.mrf.mxu0
        %v1908 = vadd.f32 %v1819, %v1907
        %1909 = vmatmul.bf16.gmra.mxu0 %v1018
        %v1910 = vpop.f32.mrf.mxu0
        %v1911 = vadd.f32 %v1822, %v1910
        %v1912 = vpop.f32.mrf.mxu0
        %v1913 = vadd.f32 %v1824, %v1912
        %1914 = vmatmul.bf16.gmra.mxu0 %v1026
        %v1915 = vpop.f32.mrf.mxu0
        %v1916 = vadd.f32 %v1827, %v1915
        %v1917 = vpop.f32.mrf.mxu0
        %v1918 = vadd.f32 %v1829, %v1917
        %1919 = vmatmul.bf16.gmra.mxu0 %v1034
        %v1920 = vpop.f32.mrf.mxu0
        %v1921 = vadd.f32 %v1832, %v1920
        %v1922 = vpop.f32.mrf.mxu0
        %v1923 = vadd.f32 %v1834, %v1922
        %1924 = vmatmul.bf16.gmra.mxu0 %v1042
        %v1925 = vpop.f32.mrf.mxu0
        %v1926 = vadd.f32 %v1837, %v1925
        %v1927 = vpop.f32.mrf.mxu0
        %v1928 = vadd.f32 %v1839, %v1927
        %1929 = vmatmul.bf16.gmra.mxu0 %v1050
        %v1930 = vpop.f32.mrf.mxu0
        %v1931 = vadd.f32 %v1842, %v1930
        %v1932 = vpop.f32.mrf.mxu0
        %v1933 = vadd.f32 %v1844, %v1932
        %1934 = vmatmul.bf16.gmra.mxu0 %v1058
        %v1935 = vpop.f32.mrf.mxu0
        %v1936 = vadd.f32 %v1847, %v1935
        %v1937 = vpop.f32.mrf.mxu0
        %v1938 = vadd.f32 %v1849, %v1937
        %1939 = vmatmul.bf16.gmra.mxu0 %v1066
        %v1940 = vpop.f32.mrf.mxu0
        %v1941 = vadd.f32 %v1852, %v1940
        %v1942 = vpop.f32.mrf.mxu0
        %v1943 = vadd.f32 %v1854, %v1942
        %1944 = vmatmul.bf16.gmra.mxu0 %v1074
        %v1945 = vpop.f32.mrf.mxu0
        %v1946 = vadd.f32 %v1857, %v1945
        %v1947 = vpop.f32.mrf.mxu0
        %v1948 = vadd.f32 %v1859, %v1947
        %1949 = vmatmul.bf16.gmra.mxu0 %v1082
        %v1950 = vpop.f32.mrf.mxu0
        %v1951 = vadd.f32 %v1862, %v1950
        %v1952 = vpop.f32.mrf.mxu0
        %v1953 = vadd.f32 %v1864, %v1952
        %1954 = vdwg.mxu0
        %1955 = vmatpush.bf16.msra.mxu0 %v1510
        %1956 = vmatpush.bf16.msra.mxu0 %v1509
        %1957 = vmatpush.bf16.msra.mxu0 %v1508
        %1958 = vmatpush.bf16.msra.mxu0 %v1507
        %1959 = vmatpush.bf16.msra.mxu0 %v1506
        %1960 = vmatpush.bf16.msra.mxu0 %v1505
        %1961 = vmatpush.bf16.msra.mxu0 %v1504
        %1962 = vmatpush.bf16.msra.mxu0 %v1503
        %1963 = vmatmul.bf16.gmra.mxu0 %v963
        %v1964 = vpop.f32.mrf.mxu0
        %v1965 = vadd.f32 %v1876, %v1964
        %v1966 = vpop.f32.mrf.mxu0
        %v1967 = vadd.f32 %v1878, %v1966
        %1968 = vmatmul.bf16.gmra.mxu0 %v971
        %v1969 = vpop.f32.mrf.mxu0
        %v1970 = vadd.f32 %v1881, %v1969
        %v1971 = vpop.f32.mrf.mxu0
        %v1972 = vadd.f32 %v1883, %v1971
        %1973 = vmatmul.bf16.gmra.mxu0 %v979
        %v1974 = vpop.f32.mrf.mxu0
        %v1975 = vadd.f32 %v1886, %v1974
        %v1976 = vpop.f32.mrf.mxu0
        %v1977 = vadd.f32 %v1888, %v1976
        %1978 = vmatmul.bf16.gmra.mxu0 %v987
        %v1979 = vpop.f32.mrf.mxu0
        %v1980 = vadd.f32 %v1891, %v1979
        %v1981 = vpop.f32.mrf.mxu0
        %v1982 = vadd.f32 %v1893, %v1981
        %1983 = vmatmul.bf16.gmra.mxu0 %v995
        %v1984 = vpop.f32.mrf.mxu0
        %v1985 = vadd.f32 %v1896, %v1984
        %v1986 = vpop.f32.mrf.mxu0
        %v1987 = vadd.f32 %v1898, %v1986
        %1988 = vmatmul.bf16.gmra.mxu0 %v1003
        %v1989 = vpop.f32.mrf.mxu0
        %v1990 = vadd.f32 %v1901, %v1989
        %v1991 = vpop.f32.mrf.mxu0
        %v1992 = vadd.f32 %v1903, %v1991
        %1993 = vmatmul.bf16.gmra.mxu0 %v1011
        %v1994 = vpop.f32.mrf.mxu0
        %v1995 = vadd.f32 %v1906, %v1994
        %v1996 = vpop.f32.mrf.mxu0
        %v1997 = vadd.f32 %v1908, %v1996
        %1998 = vmatmul.bf16.gmra.mxu0 %v1019
        %v1999 = vpop.f32.mrf.mxu0
        %v2000 = vadd.f32 %v1911, %v1999
        %v2001 = vpop.f32.mrf.mxu0
        %v2002 = vadd.f32 %v1913, %v2001
        %2003 = vmatmul.bf16.gmra.mxu0 %v1027
        %v2004 = vpop.f32.mrf.mxu0
        %v2005 = vadd.f32 %v1916, %v2004
        %v2006 = vpop.f32.mrf.mxu0
        %v2007 = vadd.f32 %v1918, %v2006
        %2008 = vmatmul.bf16.gmra.mxu0 %v1035
        %v2009 = vpop.f32.mrf.mxu0
        %v2010 = vadd.f32 %v1921, %v2009
        %v2011 = vpop.f32.mrf.mxu0
        %v2012 = vadd.f32 %v1923, %v2011
        %2013 = vmatmul.bf16.gmra.mxu0 %v1043
        %v2014 = vpop.f32.mrf.mxu0
        %v2015 = vadd.f32 %v1926, %v2014
        %v2016 = vpop.f32.mrf.mxu0
        %v2017 = vadd.f32 %v1928, %v2016
        %2018 = vmatmul.bf16.gmra.mxu0 %v1051
        %v2019 = vpop.f32.mrf.mxu0
        %v2020 = vadd.f32 %v1931, %v2019
        %v2021 = vpop.f32.mrf.mxu0
        %v2022 = vadd.f32 %v1933, %v2021
        %2023 = vmatmul.bf16.gmra.mxu0 %v1059
        %v2024 = vpop.f32.mrf.mxu0
        %v2025 = vadd.f32 %v1936, %v2024
        %v2026 = vpop.f32.mrf.mxu0
        %v2027 = vadd.f32 %v1938, %v2026
        %2028 = vmatmul.bf16.gmra.mxu0 %v1067
        %v2029 = vpop.f32.mrf.mxu0
        %v2030 = vadd.f32 %v1941, %v2029
        %v2031 = vpop.f32.mrf.mxu0
        %v2032 = vadd.f32 %v1943, %v2031
        %2033 = vmatmul.bf16.gmra.mxu0 %v1075
        %v2034 = vpop.f32.mrf.mxu0
        %v2035 = vadd.f32 %v1946, %v2034
        %v2036 = vpop.f32.mrf.mxu0
        %v2037 = vadd.f32 %v1948, %v2036
        %2038 = vmatmul.bf16.gmra.mxu0 %v1083
        %v2039 = vpop.f32.mrf.mxu0
        %v2040 = vadd.f32 %v1951, %v2039
        %v2041 = vpop.f32.mrf.mxu0
        %v2042 = vadd.f32 %v1953, %v2041
        %2043 = vdwg.mxu0
        %2044 = vmatpush.bf16.msra.mxu0 %v1518
        %2045 = vmatpush.bf16.msra.mxu0 %v1517
        %2046 = vmatpush.bf16.msra.mxu0 %v1516
        %2047 = vmatpush.bf16.msra.mxu0 %v1515
        %2048 = vmatpush.bf16.msra.mxu0 %v1514
        %2049 = vmatpush.bf16.msra.mxu0 %v1513
        %2050 = vmatpush.bf16.msra.mxu0 %v1512
        %2051 = vmatpush.bf16.msra.mxu0 %v1511
        %2052 = vmatmul.bf16.gmra.mxu0 %v964
        %v2053 = vpop.f32.mrf.mxu0
        %v2054 = vadd.f32 %v1965, %v2053
        %v2055 = vpop.f32.mrf.mxu0
        %v2056 = vadd.f32 %v1967, %v2055
        %2057 = vmatmul.bf16.gmra.mxu0 %v972
        %v2058 = vpop.f32.mrf.mxu0
        %v2059 = vadd.f32 %v1970, %v2058
        %v2060 = vpop.f32.mrf.mxu0
        %v2061 = vadd.f32 %v1972, %v2060
        %2062 = vmatmul.bf16.gmra.mxu0 %v980
        %v2063 = vpop.f32.mrf.mxu0
        %v2064 = vadd.f32 %v1975, %v2063
        %v2065 = vpop.f32.mrf.mxu0
        %v2066 = vadd.f32 %v1977, %v2065
        %2067 = vmatmul.bf16.gmra.mxu0 %v988
        %v2068 = vpop.f32.mrf.mxu0
        %v2069 = vadd.f32 %v1980, %v2068
        %v2070 = vpop.f32.mrf.mxu0
        %v2071 = vadd.f32 %v1982, %v2070
        %2072 = vmatmul.bf16.gmra.mxu0 %v996
        %v2073 = vpop.f32.mrf.mxu0
        %v2074 = vadd.f32 %v1985, %v2073
        %v2075 = vpop.f32.mrf.mxu0
        %v2076 = vadd.f32 %v1987, %v2075
        %2077 = vmatmul.bf16.gmra.mxu0 %v1004
        %v2078 = vpop.f32.mrf.mxu0
        %v2079 = vadd.f32 %v1990, %v2078
        %v2080 = vpop.f32.mrf.mxu0
        %v2081 = vadd.f32 %v1992, %v2080
        %2082 = vmatmul.bf16.gmra.mxu0 %v1012
        %v2083 = vpop.f32.mrf.mxu0
        %v2084 = vadd.f32 %v1995, %v2083
        %v2085 = vpop.f32.mrf.mxu0
        %v2086 = vadd.f32 %v1997, %v2085
        %2087 = vmatmul.bf16.gmra.mxu0 %v1020
        %v2088 = vpop.f32.mrf.mxu0
        %v2089 = vadd.f32 %v2000, %v2088
        %v2090 = vpop.f32.mrf.mxu0
        %v2091 = vadd.f32 %v2002, %v2090
        %2092 = vmatmul.bf16.gmra.mxu0 %v1028
        %v2093 = vpop.f32.mrf.mxu0
        %v2094 = vadd.f32 %v2005, %v2093
        %v2095 = vpop.f32.mrf.mxu0
        %v2096 = vadd.f32 %v2007, %v2095
        %2097 = vmatmul.bf16.gmra.mxu0 %v1036
        %v2098 = vpop.f32.mrf.mxu0
        %v2099 = vadd.f32 %v2010, %v2098
        %v2100 = vpop.f32.mrf.mxu0
        %v2101 = vadd.f32 %v2012, %v2100
        %2102 = vmatmul.bf16.gmra.mxu0 %v1044
        %v2103 = vpop.f32.mrf.mxu0
        %v2104 = vadd.f32 %v2015, %v2103
        %v2105 = vpop.f32.mrf.mxu0
        %v2106 = vadd.f32 %v2017, %v2105
        %2107 = vmatmul.bf16.gmra.mxu0 %v1052
        %v2108 = vpop.f32.mrf.mxu0
        %v2109 = vadd.f32 %v2020, %v2108
        %v2110 = vpop.f32.mrf.mxu0
        %v2111 = vadd.f32 %v2022, %v2110
        %2112 = vmatmul.bf16.gmra.mxu0 %v1060
        %v2113 = vpop.f32.mrf.mxu0
        %v2114 = vadd.f32 %v2025, %v2113
        %v2115 = vpop.f32.mrf.mxu0
        %v2116 = vadd.f32 %v2027, %v2115
        %2117 = vmatmul.bf16.gmra.mxu0 %v1068
        %v2118 = vpop.f32.mrf.mxu0
        %v2119 = vadd.f32 %v2030, %v2118
        %v2120 = vpop.f32.mrf.mxu0
        %v2121 = vadd.f32 %v2032, %v2120
        %2122 = vmatmul.bf16.gmra.mxu0 %v1076
        %v2123 = vpop.f32.mrf.mxu0
        %v2124 = vadd.f32 %v2035, %v2123
        %v2125 = vpop.f32.mrf.mxu0
        %v2126 = vadd.f32 %v2037, %v2125
        %2127 = vmatmul.bf16.gmra.mxu0 %v1084
        %v2128 = vpop.f32.mrf.mxu0
        %v2129 = vadd.f32 %v2040, %v2128
        %v2130 = vpop.f32.mrf.mxu0
        %v2131 = vadd.f32 %v2042, %v2130
        %2132 = vdwg.mxu0
        %2133 = vmatpush.bf16.msra.mxu0 %v1526
        %2134 = vmatpush.bf16.msra.mxu0 %v1525
        %2135 = vmatpush.bf16.msra.mxu0 %v1524
        %2136 = vmatpush.bf16.msra.mxu0 %v1523
        %2137 = vmatpush.bf16.msra.mxu0 %v1522
        %2138 = vmatpush.bf16.msra.mxu0 %v1521
        %2139 = vmatpush.bf16.msra.mxu0 %v1520
        %2140 = vmatpush.bf16.msra.mxu0 %v1519
        %2141 = vmatmul.bf16.gmra.mxu0 %v965
        %v2142 = vpop.f32.mrf.mxu0
        %v2143 = vadd.f32 %v2054, %v2142
        %v2144 = vpop.f32.mrf.mxu0
        %v2145 = vadd.f32 %v2056, %v2144
        %2146 = vmatmul.bf16.gmra.mxu0 %v973
        %v2147 = vpop.f32.mrf.mxu0
        %v2148 = vadd.f32 %v2059, %v2147
        %v2149 = vpop.f32.mrf.mxu0
        %v2150 = vadd.f32 %v2061, %v2149
        %2151 = vmatmul.bf16.gmra.mxu0 %v981
        %v2152 = vpop.f32.mrf.mxu0
        %v2153 = vadd.f32 %v2064, %v2152
        %v2154 = vpop.f32.mrf.mxu0
        %v2155 = vadd.f32 %v2066, %v2154
        %2156 = vmatmul.bf16.gmra.mxu0 %v989
        %v2157 = vpop.f32.mrf.mxu0
        %v2158 = vadd.f32 %v2069, %v2157
        %v2159 = vpop.f32.mrf.mxu0
        %v2160 = vadd.f32 %v2071, %v2159
        %2161 = vmatmul.bf16.gmra.mxu0 %v997
        %v2162 = vpop.f32.mrf.mxu0
        %v2163 = vadd.f32 %v2074, %v2162
        %v2164 = vpop.f32.mrf.mxu0
        %v2165 = vadd.f32 %v2076, %v2164
        %2166 = vmatmul.bf16.gmra.mxu0 %v1005
        %v2167 = vpop.f32.mrf.mxu0
        %v2168 = vadd.f32 %v2079, %v2167
        %v2169 = vpop.f32.mrf.mxu0
        %v2170 = vadd.f32 %v2081, %v2169
        %2171 = vmatmul.bf16.gmra.mxu0 %v1013
        %v2172 = vpop.f32.mrf.mxu0
        %v2173 = vadd.f32 %v2084, %v2172
        %v2174 = vpop.f32.mrf.mxu0
        %v2175 = vadd.f32 %v2086, %v2174
        %2176 = vmatmul.bf16.gmra.mxu0 %v1021
        %v2177 = vpop.f32.mrf.mxu0
        %v2178 = vadd.f32 %v2089, %v2177
        %v2179 = vpop.f32.mrf.mxu0
        %v2180 = vadd.f32 %v2091, %v2179
        %2181 = vmatmul.bf16.gmra.mxu0 %v1029
        %v2182 = vpop.f32.mrf.mxu0
        %v2183 = vadd.f32 %v2094, %v2182
        %v2184 = vpop.f32.mrf.mxu0
        %v2185 = vadd.f32 %v2096, %v2184
        %2186 = vmatmul.bf16.gmra.mxu0 %v1037
        %v2187 = vpop.f32.mrf.mxu0
        %v2188 = vadd.f32 %v2099, %v2187
        %v2189 = vpop.f32.mrf.mxu0
        %v2190 = vadd.f32 %v2101, %v2189
        %2191 = vmatmul.bf16.gmra.mxu0 %v1045
        %v2192 = vpop.f32.mrf.mxu0
        %v2193 = vadd.f32 %v2104, %v2192
        %v2194 = vpop.f32.mrf.mxu0
        %v2195 = vadd.f32 %v2106, %v2194
        %2196 = vmatmul.bf16.gmra.mxu0 %v1053
        %v2197 = vpop.f32.mrf.mxu0
        %v2198 = vadd.f32 %v2109, %v2197
        %v2199 = vpop.f32.mrf.mxu0
        %v2200 = vadd.f32 %v2111, %v2199
        %2201 = vmatmul.bf16.gmra.mxu0 %v1061
        %v2202 = vpop.f32.mrf.mxu0
        %v2203 = vadd.f32 %v2114, %v2202
        %v2204 = vpop.f32.mrf.mxu0
        %v2205 = vadd.f32 %v2116, %v2204
        %2206 = vmatmul.bf16.gmra.mxu0 %v1069
        %v2207 = vpop.f32.mrf.mxu0
        %v2208 = vadd.f32 %v2119, %v2207
        %v2209 = vpop.f32.mrf.mxu0
        %v2210 = vadd.f32 %v2121, %v2209
        %2211 = vmatmul.bf16.gmra.mxu0 %v1077
        %v2212 = vpop.f32.mrf.mxu0
        %v2213 = vadd.f32 %v2124, %v2212
        %v2214 = vpop.f32.mrf.mxu0
        %v2215 = vadd.f32 %v2126, %v2214
        %2216 = vmatmul.bf16.gmra.mxu0 %v1085
        %v2217 = vpop.f32.mrf.mxu0
        %v2218 = vadd.f32 %v2129, %v2217
        %v2219 = vpop.f32.mrf.mxu0
        %v2220 = vadd.f32 %v2131, %v2219
        %2221 = vdwg.mxu0
        %2222 = vmatpush.bf16.msra.mxu0 %v1534
        %2223 = vmatpush.bf16.msra.mxu0 %v1533
        %2224 = vmatpush.bf16.msra.mxu0 %v1532
        %2225 = vmatpush.bf16.msra.mxu0 %v1531
        %2226 = vmatpush.bf16.msra.mxu0 %v1530
        %2227 = vmatpush.bf16.msra.mxu0 %v1529
        %2228 = vmatpush.bf16.msra.mxu0 %v1528
        %2229 = vmatpush.bf16.msra.mxu0 %v1527
        %2230 = vmatmul.bf16.gmra.mxu0 %v966
        %v2231 = vpop.f32.mrf.mxu0
        %v2232 = vadd.f32 %v2143, %v2231
        %v2233 = vpop.f32.mrf.mxu0
        %v2234 = vadd.f32 %v2145, %v2233
        %2235 = vmatmul.bf16.gmra.mxu0 %v974
        %v2236 = vpop.f32.mrf.mxu0
        %v2237 = vadd.f32 %v2148, %v2236
        %v2238 = vpop.f32.mrf.mxu0
        %v2239 = vadd.f32 %v2150, %v2238
        %2240 = vmatmul.bf16.gmra.mxu0 %v982
        %v2241 = vpop.f32.mrf.mxu0
        %v2242 = vadd.f32 %v2153, %v2241
        %v2243 = vpop.f32.mrf.mxu0
        %v2244 = vadd.f32 %v2155, %v2243
        %2245 = vmatmul.bf16.gmra.mxu0 %v990
        %v2246 = vpop.f32.mrf.mxu0
        %v2247 = vadd.f32 %v2158, %v2246
        %v2248 = vpop.f32.mrf.mxu0
        %v2249 = vadd.f32 %v2160, %v2248
        %2250 = vmatmul.bf16.gmra.mxu0 %v998
        %v2251 = vpop.f32.mrf.mxu0
        %v2252 = vadd.f32 %v2163, %v2251
        %v2253 = vpop.f32.mrf.mxu0
        %v2254 = vadd.f32 %v2165, %v2253
        %2255 = vmatmul.bf16.gmra.mxu0 %v1006
        %v2256 = vpop.f32.mrf.mxu0
        %v2257 = vadd.f32 %v2168, %v2256
        %v2258 = vpop.f32.mrf.mxu0
        %v2259 = vadd.f32 %v2170, %v2258
        %2260 = vmatmul.bf16.gmra.mxu0 %v1014
        %v2261 = vpop.f32.mrf.mxu0
        %v2262 = vadd.f32 %v2173, %v2261
        %v2263 = vpop.f32.mrf.mxu0
        %v2264 = vadd.f32 %v2175, %v2263
        %2265 = vmatmul.bf16.gmra.mxu0 %v1022
        %v2266 = vpop.f32.mrf.mxu0
        %v2267 = vadd.f32 %v2178, %v2266
        %v2268 = vpop.f32.mrf.mxu0
        %v2269 = vadd.f32 %v2180, %v2268
        %2270 = vmatmul.bf16.gmra.mxu0 %v1030
        %v2271 = vpop.f32.mrf.mxu0
        %v2272 = vadd.f32 %v2183, %v2271
        %v2273 = vpop.f32.mrf.mxu0
        %v2274 = vadd.f32 %v2185, %v2273
        %2275 = vmatmul.bf16.gmra.mxu0 %v1038
        %v2276 = vpop.f32.mrf.mxu0
        %v2277 = vadd.f32 %v2188, %v2276
        %v2278 = vpop.f32.mrf.mxu0
        %v2279 = vadd.f32 %v2190, %v2278
        %2280 = vmatmul.bf16.gmra.mxu0 %v1046
        %v2281 = vpop.f32.mrf.mxu0
        %v2282 = vadd.f32 %v2193, %v2281
        %v2283 = vpop.f32.mrf.mxu0
        %v2284 = vadd.f32 %v2195, %v2283
        %2285 = vmatmul.bf16.gmra.mxu0 %v1054
        %v2286 = vpop.f32.mrf.mxu0
        %v2287 = vadd.f32 %v2198, %v2286
        %v2288 = vpop.f32.mrf.mxu0
        %v2289 = vadd.f32 %v2200, %v2288
        %2290 = vmatmul.bf16.gmra.mxu0 %v1062
        %v2291 = vpop.f32.mrf.mxu0
        %v2292 = vadd.f32 %v2203, %v2291
        %v2293 = vpop.f32.mrf.mxu0
        %v2294 = vadd.f32 %v2205, %v2293
        %2295 = vmatmul.bf16.gmra.mxu0 %v1070
        %v2296 = vpop.f32.mrf.mxu0
        %v2297 = vadd.f32 %v2208, %v2296
        %v2298 = vpop.f32.mrf.mxu0
        %v2299 = vadd.f32 %v2210, %v2298
        %2300 = vmatmul.bf16.gmra.mxu0 %v1078
        %v2301 = vpop.f32.mrf.mxu0
        %v2302 = vadd.f32 %v2213, %v2301
        %v2303 = vpop.f32.mrf.mxu0
        %v2304 = vadd.f32 %v2215, %v2303
        %2305 = vmatmul.bf16.gmra.mxu0 %v1086
        %v2306 = vpop.f32.mrf.mxu0
        %v2307 = vadd.f32 %v2218, %v2306
        %v2308 = vpop.f32.mrf.mxu0
        %v2309 = vadd.f32 %v2220, %v2308
        %2310 = vdwg.mxu0
        %v2311 = vadd.f32 %v287, %v2232
        %v2312 = vadd.f32 %v288, %v2234
        %v2313 = vadd.f32 %v289, %v2237
        %v2314 = vadd.f32 %v290, %v2239
        %v2315 = vadd.f32 %v291, %v2242
        %v2316 = vadd.f32 %v292, %v2244
        %v2317 = vadd.f32 %v293, %v2247
        %v2318 = vadd.f32 %v294, %v2249
        %v2319 = vadd.f32 %v295, %v2252
        %v2320 = vadd.f32 %v296, %v2254
        %v2321 = vadd.f32 %v297, %v2257
        %v2322 = vadd.f32 %v298, %v2259
        %v2323 = vadd.f32 %v299, %v2262
        %v2324 = vadd.f32 %v300, %v2264
        %v2325 = vadd.f32 %v301, %v2267
        %v2326 = vadd.f32 %v302, %v2269
        %v2327 = vadd.f32 %v303, %v2272
        %v2328 = vadd.f32 %v304, %v2274
        %v2329 = vadd.f32 %v305, %v2277
        %v2330 = vadd.f32 %v306, %v2279
        %v2331 = vadd.f32 %v307, %v2282
        %v2332 = vadd.f32 %v308, %v2284
        %v2333 = vadd.f32 %v309, %v2287
        %v2334 = vadd.f32 %v310, %v2289
        %v2335 = vadd.f32 %v311, %v2292
        %v2336 = vadd.f32 %v312, %v2294
        %v2337 = vadd.f32 %v313, %v2297
        %v2338 = vadd.f32 %v314, %v2299
        %v2339 = vadd.f32 %v315, %v2302
        %v2340 = vadd.f32 %v316, %v2304
        %v2341 = vadd.f32 %v317, %v2307
        %v2342 = vadd.f32 %v318, %v2309
        %vm2343 = vcmask 785408
        %2344 = vst.msk [vmem:[#allocation2] sm:$0xff] %vm2343, %v2311
        %2345 = vst.msk [vmem:[#allocation2 + $0x8] sm:$0xff] %vm2343, %v2312
        %2346 = vst.msk [vmem:[#allocation2 + $0x10] sm:$0xff] %vm2343, %v2313
        %2347 = vst.msk [vmem:[#allocation2 + $0x18] sm:$0xff] %vm2343, %v2314
        %2348 = vst.msk [vmem:[#allocation2 + $0x20] sm:$0xff] %vm2343, %v2315
        %2349 = vst.msk [vmem:[#allocation2 + $0x28] sm:$0xff] %vm2343, %v2316
        %2350 = vst.msk [vmem:[#allocation2 + $0x30] sm:$0xff] %vm2343, %v2317
        %2351 = vst.msk [vmem:[#allocation2 + $0x38] sm:$0xff] %vm2343, %v2318
        %2352 = vst.msk [vmem:[#allocation2 + $0x40] sm:$0xff] %vm2343, %v2319
        %2353 = vst.msk [vmem:[#allocation2 + $0x48] sm:$0xff] %vm2343, %v2320
        %2354 = vst.msk [vmem:[#allocation2 + $0x50] sm:$0xff] %vm2343, %v2321
        %2355 = vst.msk [vmem:[#allocation2 + $0x58] sm:$0xff] %vm2343, %v2322
        %2356 = vst.msk [vmem:[#allocation2 + $0x60] sm:$0xff] %vm2343, %v2323
        %2357 = vst.msk [vmem:[#allocation2 + $0x68] sm:$0xff] %vm2343, %v2324
        %2358 = vst.msk [vmem:[#allocation2 + $0x70] sm:$0xff] %vm2343, %v2325
        %2359 = vst.msk [vmem:[#allocation2 + $0x78] sm:$0xff] %vm2343, %v2326
        %2360 = vst.msk [vmem:[#allocation2 + $0x80] sm:$0xff] %vm2343, %v2327
        %2361 = vst.msk [vmem:[#allocation2 + $0x88] sm:$0xff] %vm2343, %v2328
        %2362 = vst.msk [vmem:[#allocation2 + $0x90] sm:$0xff] %vm2343, %v2329
        %2363 = vst.msk [vmem:[#allocation2 + $0x98] sm:$0xff] %vm2343, %v2330
        %2364 = vst.msk [vmem:[#allocation2 + $0xa0] sm:$0xff] %vm2343, %v2331
        %2365 = vst.msk [vmem:[#allocation2 + $0xa8] sm:$0xff] %vm2343, %v2332
        %2366 = vst.msk [vmem:[#allocation2 + $0xb0] sm:$0xff] %vm2343, %v2333
        %2367 = vst.msk [vmem:[#allocation2 + $0xb8] sm:$0xff] %vm2343, %v2334
        %2368 = vst.msk [vmem:[#allocation2 + $0xc0] sm:$0xff] %vm2343, %v2335
        %2369 = vst.msk [vmem:[#allocation2 + $0xc8] sm:$0xff] %vm2343, %v2336
        %2370 = vst.msk [vmem:[#allocation2 + $0xd0] sm:$0xff] %vm2343, %v2337
        %2371 = vst.msk [vmem:[#allocation2 + $0xd8] sm:$0xff] %vm2343, %v2338
        %2372 = vst.msk [vmem:[#allocation2 + $0xe0] sm:$0xff] %vm2343, %v2339
        %2373 = vst.msk [vmem:[#allocation2 + $0xe8] sm:$0xff] %vm2343, %v2340
        %2374 = vst.msk [vmem:[#allocation2 + $0xf0] sm:$0xff] %vm2343, %v2341
        %2375 = vst.msk [vmem:[#allocation2 + $0xf8] sm:$0xff] %vm2343, %v2342
        %p2376 = scmp.eq.s32.totalorder %s23, 2
        // Predicated region
        $region45: #{tpu_custom_call.1} parent=31 // pred_check
          %p2377 = pneg %p2376
        $region46: #{tpu_custom_call.1} parent=31 // pred_check_branch
          %2379 = sbr.rel (%p2377) target = $region48
        $region47: #{tpu_custom_call.1} parent=31 // pred_region
          %v2380 = vld [vmem:[#allocation2] sm:$0xff]
          %v2381 = vld [vmem:[#allocation2 + $0x8] sm:$0xff]
          %v2382 = vld [vmem:[#allocation2 + $0x10] sm:$0xff]
          %v2383 = vld [vmem:[#allocation2 + $0x18] sm:$0xff]
          %v2384 = vld [vmem:[#allocation2 + $0x20] sm:$0xff]
          %v2385 = vld [vmem:[#allocation2 + $0x28] sm:$0xff]
          %v2386 = vld [vmem:[#allocation2 + $0x30] sm:$0xff]
          %v2387 = vld [vmem:[#allocation2 + $0x38] sm:$0xff]
          %v2388 = vld [vmem:[#allocation2 + $0x40] sm:$0xff]
          %v2389 = vld [vmem:[#allocation2 + $0x48] sm:$0xff]
          %v2390 = vld [vmem:[#allocation2 + $0x50] sm:$0xff]
          %v2391 = vld [vmem:[#allocation2 + $0x58] sm:$0xff]
          %v2392 = vld [vmem:[#allocation2 + $0x60] sm:$0xff]
          %v2393 = vld [vmem:[#allocation2 + $0x68] sm:$0xff]
          %v2394 = vld [vmem:[#allocation2 + $0x70] sm:$0xff]
          %v2395 = vld [vmem:[#allocation2 + $0x78] sm:$0xff]
          %v2396 = vld [vmem:[#allocation2 + $0x80] sm:$0xff]
          %v2397 = vld [vmem:[#allocation2 + $0x88] sm:$0xff]
          %v2398 = vld [vmem:[#allocation2 + $0x90] sm:$0xff]
          %v2399 = vld [vmem:[#allocation2 + $0x98] sm:$0xff]
          %v2400 = vld [vmem:[#allocation2 + $0xa0] sm:$0xff]
          %v2401 = vld [vmem:[#allocation2 + $0xa8] sm:$0xff]
          %v2402 = vld [vmem:[#allocation2 + $0xb0] sm:$0xff]
          %v2403 = vld [vmem:[#allocation2 + $0xb8] sm:$0xff]
          %v2404 = vld [vmem:[#allocation2 + $0xc0] sm:$0xff]
          %v2405 = vld [vmem:[#allocation2 + $0xc8] sm:$0xff]
          %v2406 = vld [vmem:[#allocation2 + $0xd0] sm:$0xff]
          %v2407 = vld [vmem:[#allocation2 + $0xd8] sm:$0xff]
          %v2408 = vld [vmem:[#allocation2 + $0xe0] sm:$0xff]
          %v2409 = vld [vmem:[#allocation2 + $0xe8] sm:$0xff]
          %v2410 = vld [vmem:[#allocation2 + $0xf0] sm:$0xff]
          %v2411 = vld [vmem:[#allocation2 + $0xf8] sm:$0xff]
          %v2412 = vld [vmem:[#allocation5] sm:$0x1]
          %v2414 = vperm.slane %v2412, 0
          %v2416 = vadd.f32 %v2380, %v2414
          %v2417 = vadd.f32 %v2381, %v2414
          %v2418 = vadd.f32 %v2382, %v2414
          %v2419 = vadd.f32 %v2383, %v2414
          %v2420 = vadd.f32 %v2384, %v2414
          %v2421 = vadd.f32 %v2385, %v2414
          %v2422 = vadd.f32 %v2386, %v2414
          %v2423 = vadd.f32 %v2387, %v2414
          %v2424 = vadd.f32 %v2388, %v2414
          %v2425 = vadd.f32 %v2389, %v2414
          %v2426 = vadd.f32 %v2390, %v2414
          %v2427 = vadd.f32 %v2391, %v2414
          %v2428 = vadd.f32 %v2392, %v2414
          %v2429 = vadd.f32 %v2393, %v2414
          %v2430 = vadd.f32 %v2394, %v2414
          %v2431 = vadd.f32 %v2395, %v2414
          %v2432 = vadd.f32 %v2396, %v2414
          %v2433 = vadd.f32 %v2397, %v2414
          %v2434 = vadd.f32 %v2398, %v2414
          %v2435 = vadd.f32 %v2399, %v2414
          %v2436 = vadd.f32 %v2400, %v2414
          %v2437 = vadd.f32 %v2401, %v2414
          %v2438 = vadd.f32 %v2402, %v2414
          %v2439 = vadd.f32 %v2403, %v2414
          %v2440 = vadd.f32 %v2404, %v2414
          %v2441 = vadd.f32 %v2405, %v2414
          %v2442 = vadd.f32 %v2406, %v2414
          %v2443 = vadd.f32 %v2407, %v2414
          %v2444 = vadd.f32 %v2408, %v2414
          %v2445 = vadd.f32 %v2409, %v2414
          %v2446 = vadd.f32 %v2410, %v2414
          %v2447 = vadd.f32 %v2411, %v2414
          %v2448 = vmax.f32 %v2416, 0.0
          %v2449 = vmax.f32 %v2417, 0.0
          %v2450 = vmax.f32 %v2418, 0.0
          %v2451 = vmax.f32 %v2419, 0.0
          %v2452 = vmax.f32 %v2420, 0.0
          %v2453 = vmax.f32 %v2421, 0.0
          %v2454 = vmax.f32 %v2422, 0.0
          %v2455 = vmax.f32 %v2423, 0.0
          %v2456 = vmax.f32 %v2424, 0.0
          %v2457 = vmax.f32 %v2425, 0.0
          %v2458 = vmax.f32 %v2426, 0.0
          %v2459 = vmax.f32 %v2427, 0.0
          %v2460 = vmax.f32 %v2428, 0.0
          %v2461 = vmax.f32 %v2429, 0.0
          %v2462 = vmax.f32 %v2430, 0.0
          %v2463 = vmax.f32 %v2431, 0.0
          %v2464 = vmax.f32 %v2432, 0.0
          %v2465 = vmax.f32 %v2433, 0.0
          %v2466 = vmax.f32 %v2434, 0.0
          %v2467 = vmax.f32 %v2435, 0.0
          %v2468 = vmax.f32 %v2436, 0.0
          %v2469 = vmax.f32 %v2437, 0.0
          %v2470 = vmax.f32 %v2438, 0.0
          %v2471 = vmax.f32 %v2439, 0.0
          %v2472 = vmax.f32 %v2440, 0.0
          %v2473 = vmax.f32 %v2441, 0.0
          %v2474 = vmax.f32 %v2442, 0.0
          %v2475 = vmax.f32 %v2443, 0.0
          %v2476 = vmax.f32 %v2444, 0.0
          %v2477 = vmax.f32 %v2445, 0.0
          %v2478 = vmax.f32 %v2446, 0.0
          %v2479 = vmax.f32 %v2447, 0.0
          %v2480 = vpack.c.bf16 %v2448, %v2448
          %v2481 = vpack.c.bf16 %v2449, %v2449
          %v2482 = vpack.c.bf16 %v2450, %v2450
          %v2483 = vpack.c.bf16 %v2451, %v2451
          %v2484 = vpack.c.bf16 %v2452, %v2452
          %v2485 = vpack.c.bf16 %v2453, %v2453
          %v2486 = vpack.c.bf16 %v2454, %v2454
          %v2487 = vpack.c.bf16 %v2455, %v2455
          %v2488 = vpack.c.bf16 %v2456, %v2456
          %v2489 = vpack.c.bf16 %v2457, %v2457
          %v2490 = vpack.c.bf16 %v2458, %v2458
          %v2491 = vpack.c.bf16 %v2459, %v2459
          %v2492 = vpack.c.bf16 %v2460, %v2460
          %v2493 = vpack.c.bf16 %v2461, %v2461
          %v2494 = vpack.c.bf16 %v2462, %v2462
          %v2495 = vpack.c.bf16 %v2463, %v2463
          %v2496 = vpack.c.bf16 %v2464, %v2464
          %v2497 = vpack.c.bf16 %v2465, %v2465
          %v2498 = vpack.c.bf16 %v2466, %v2466
          %v2499 = vpack.c.bf16 %v2467, %v2467
          %v2500 = vpack.c.bf16 %v2468, %v2468
          %v2501 = vpack.c.bf16 %v2469, %v2469
          %v2502 = vpack.c.bf16 %v2470, %v2470
          %v2503 = vpack.c.bf16 %v2471, %v2471
          %v2504 = vpack.c.bf16 %v2472, %v2472
          %v2505 = vpack.c.bf16 %v2473, %v2473
          %v2506 = vpack.c.bf16 %v2474, %v2474
          %v2507 = vpack.c.bf16 %v2475, %v2475
          %v2508 = vpack.c.bf16 %v2476, %v2476
          %v2509 = vpack.c.bf16 %v2477, %v2477
          %v2510 = vpack.c.bf16 %v2478, %v2478
          %v2511 = vpack.c.bf16 %v2479, %v2479
          %vm2512 = vcmask 781312
          %2513 = vst.msk [vmem:[%s248] sm:$0xf] %vm2512, %v2480
          %2514 = vst.msk [vmem:[%s248 + $0x4] sm:$0xf] %vm2512, %v2481
          %2515 = vst.msk [vmem:[%s248 + $0x8] sm:$0xf] %vm2512, %v2482
          %2516 = vst.msk [vmem:[%s248 + $0xc] sm:$0xf] %vm2512, %v2483
          %2517 = vst.msk [vmem:[%s248 + $0x10] sm:$0xf] %vm2512, %v2484
          %2518 = vst.msk [vmem:[%s248 + $0x14] sm:$0xf] %vm2512, %v2485
          %2519 = vst.msk [vmem:[%s248 + $0x18] sm:$0xf] %vm2512, %v2486
          %2520 = vst.msk [vmem:[%s248 + $0x1c] sm:$0xf] %vm2512, %v2487
          %2521 = vst.msk [vmem:[%s248 + $0x20] sm:$0xf] %vm2512, %v2488
          %2522 = vst.msk [vmem:[%s248 + $0x24] sm:$0xf] %vm2512, %v2489
          %2523 = vst.msk [vmem:[%s248 + $0x28] sm:$0xf] %vm2512, %v2490
          %2524 = vst.msk [vmem:[%s248 + $0x2c] sm:$0xf] %vm2512, %v2491
          %2525 = vst.msk [vmem:[%s248 + $0x30] sm:$0xf] %vm2512, %v2492
          %2526 = vst.msk [vmem:[%s248 + $0x34] sm:$0xf] %vm2512, %v2493
          %2527 = vst.msk [vmem:[%s248 + $0x38] sm:$0xf] %vm2512, %v2494
          %2528 = vst.msk [vmem:[%s248 + $0x3c] sm:$0xf] %vm2512, %v2495
          %2529 = vst.msk [vmem:[%s248 + $0x40] sm:$0xf] %vm2512, %v2496
          %2530 = vst.msk [vmem:[%s248 + $0x44] sm:$0xf] %vm2512, %v2497
          %2531 = vst.msk [vmem:[%s248 + $0x48] sm:$0xf] %vm2512, %v2498
          %2532 = vst.msk [vmem:[%s248 + $0x4c] sm:$0xf] %vm2512, %v2499
          %2533 = vst.msk [vmem:[%s248 + $0x50] sm:$0xf] %vm2512, %v2500
          %2534 = vst.msk [vmem:[%s248 + $0x54] sm:$0xf] %vm2512, %v2501
          %2535 = vst.msk [vmem:[%s248 + $0x58] sm:$0xf] %vm2512, %v2502
          %2536 = vst.msk [vmem:[%s248 + $0x5c] sm:$0xf] %vm2512, %v2503
          %2537 = vst.msk [vmem:[%s248 + $0x60] sm:$0xf] %vm2512, %v2504
          %2538 = vst.msk [vmem:[%s248 + $0x64] sm:$0xf] %vm2512, %v2505
          %2539 = vst.msk [vmem:[%s248 + $0x68] sm:$0xf] %vm2512, %v2506
          %2540 = vst.msk [vmem:[%s248 + $0x6c] sm:$0xf] %vm2512, %v2507
          %2541 = vst.msk [vmem:[%s248 + $0x70] sm:$0xf] %vm2512, %v2508
          %2542 = vst.msk [vmem:[%s248 + $0x74] sm:$0xf] %vm2512, %v2509
          %2543 = vst.msk [vmem:[%s248 + $0x78] sm:$0xf] %vm2512, %v2510
          %2544 = vst.msk [vmem:[%s248 + $0x7c] sm:$0xf] %vm2512, %v2511
        $region48: #{tpu_custom_call.1} parent=31 // pred_fallthru
          _
        %s2545 = smul.u32 32, %s22
        %p2546 = scmp.lt.s32.totalorder %s2545, 63
        %s2547 = scalar_select %p2546, %s2545, 63
        %s2548 = smul.addr %s2547, 4
        %s2549 = scalar_lea.vmem %s3, %s2548
        // Predicated region
        $region49: #{tpu_custom_call.1} parent=31 // pred_check
          %p2550 = pneg %p123
        $region50: #{tpu_custom_call.1} parent=31 // pred_check_branch
          %2552 = sbr.rel (%p2550) target = $region52
        $region51: #{tpu_custom_call.1} parent=31 // pred_region
          %s2553 = smul.u32 32, %s22
        $region52: #{tpu_custom_call.1} parent=31 // pred_fallthru
          _
      $region32: #{tpu_custom_call.1} parent=5 // pred_fallthru
        _
      %p2554 = scmp.le.s32.totalorder 2, %s13
      // Predicated region
      $region53: #{tpu_custom_call.1} parent=5 // pred_check
        %p2555 = pneg %p2554
      $region54: #{tpu_custom_call.1} parent=5 // pred_check_branch
        %2557 = sbr.rel (%p2555) target = $region56
      $region55: #{tpu_custom_call.1} parent=5 // pred_region
        %s2558 = ssub.s32 %s13, 2
        // Predicated region
        $region57: #{tpu_custom_call.1} parent=55 // pred_check
          %p2559 = pneg %p129
        $region58: #{tpu_custom_call.1} parent=55 // pred_check_branch
          %2561 = sbr.rel (%p2559) target = $region60
        $region59: #{tpu_custom_call.1} parent=55 // pred_region
          %s2562 = smul.u32 32, %s24
          %p2563 = scmp.lt.s32.totalorder %s2562, 63
          %s2564 = scalar_select %p2563, %s2562, 63
          %s2565 = smul.addr %s2564, 4
          %s2566 = scalar_lea.vmem %s3, %s2565
        $region60: #{tpu_custom_call.1} parent=55 // pred_fallthru
          _
      $region56: #{tpu_custom_call.1} parent=5 // pred_fallthru
        _
    $region6: #{tpu_custom_call.1} parent=1 // loop_footer
      %s17 = sadd.s32 1, %s13
    $region7: #{tpu_custom_call.1} parent=1 // loop_footer_branch
      %12 = sbr.rel target = $region3
    $region8: #{tpu_custom_call.1} parent=1 // loop_exit
      _
    %2567 = vsyncpa [#allocation4], 1
    %s2568 = scalar_lea.sflag [#allocation4], 1
    %2569 = vsyncpa %s2568, 1
    %2570 = vsyncpa [#allocation6], 1

</llo_original>
